<compile_context>
chip_gen: v6e
topology: v6e:2x2x1
jax: 0.10.0
libtpu: 0.0.40
codegen_flags: <defaults>
</compile_context>

<pallas_src>
import jax
import jax.numpy as jnp
from jax.experimental import pallas as pl
from jax.experimental.pallas import tpu as pltpu

N = 16        # nodes per graph
F = 8         # data.num_features
C = 4         # GAT hidden channels
CR = 2        # channel-attention reduction dim (C // 2)
NEG_SLOPE = 0.2

# ---------------------------------------------------------------------------
# packed-parameter slab layout: (P_ROWS, P_COLS) f32, built host-side
# ---------------------------------------------------------------------------
P_COLS = 8
_R_W1 = 0        # rows  0..7  : [w1 | w1@a_dst1 | w1@a_src1 | wres@wfc]  (F, C+3)
_R_W2 = 8        # rows  8..11 : [w2 | w2@a_dst2 | w2@a_src2]             (C, C+2)
_R_B1 = 12       # row  12     : conv1 bias                               (1, C)
_R_B2 = 13       # row  13     : conv2 bias                               (1, C)
_R_CA1W1 = 14    # rows 14..17 : ca1 mlp w1                               (C, CR)
_R_CA1W2 = 18    # rows 18..19 : ca1 mlp w2                               (CR, C)
_R_CA2W1 = 20    # rows 20..23 : ca2 mlp w1                               (C, CR)
_R_CA2W2 = 24    # rows 24..27 : ca2 mlp w2                               (CR, C)
_R_WFC = 28      # rows 28..31 : fc weight                                (C, 1)
_R_BIAS = 32     # row  32     : bres@wfc + bfc                           (1, 1)
P_ROWS = 40      # padded up to a multiple of 8 sublanes


def pack_params(params):
    """Fold + pack the 16 PyTorch-style parameter tensors into one VMEM slab."""
    (w1, a_src1, a_dst1, b1, ca1_w1, ca1_w2,
     w2, a_src2, a_dst2, b2, ca2_w1, ca2_w2,
     wres, bres, wfc, bfc) = params

    w1_ext = jnp.concatenate([w1, w1 @ a_dst1, w1 @ a_src1, wres @ wfc], axis=1)  # (F, C+3)
    w2_ext = jnp.concatenate([w2, w2 @ a_dst2, w2 @ a_src2], axis=1)              # (C, C+2)
    bias_total = bres @ wfc + bfc                                                 # (1, 1)

    slab = jnp.zeros((P_ROWS, P_COLS), jnp.float32)
    slab = slab.at[_R_W1:_R_W1 + F, 0:C + 3].set(w1_ext)
    slab = slab.at[_R_W2:_R_W2 + C, 0:C + 2].set(w2_ext)
    slab = slab.at[_R_B1:_R_B1 + 1, 0:C].set(b1)
    slab = slab.at[_R_B2:_R_B2 + 1, 0:C].set(b2)
    slab = slab.at[_R_CA1W1:_R_CA1W1 + C, 0:CR].set(ca1_w1)
    slab = slab.at[_R_CA1W2:_R_CA1W2 + CR, 0:C].set(ca1_w2)
    slab = slab.at[_R_CA2W1:_R_CA2W1 + C, 0:CR].set(ca2_w1)
    slab = slab.at[_R_CA2W2:_R_CA2W2 + CR, 0:C].set(ca2_w2)
    slab = slab.at[_R_WFC:_R_WFC + C, 0:1].set(wfc)
    slab = slab.at[_R_BIAS:_R_BIAS + 1, 0:1].set(bias_total)
    return slab


# ---------------------------------------------------------------------------
# in-kernel building blocks
# ---------------------------------------------------------------------------
def _gat_aggregate(h, s_dst, s_src, adj, bias):
    # h: (N, C), s_dst/s_src: (N, 1), adj: (N, N) mask with self-loops, bias: (1, C)
    e = s_dst + s_src.T                                  # e[i, j] = s_dst[i] + s_src[j]
    e = jnp.where(e > 0, e, NEG_SLOPE * e)               # LeakyReLU(0.2)
    e = jnp.where(adj > 0, e, -1e30)                     # mask non-edges
    e = e - jnp.max(e, axis=1, keepdims=True)
    p = jnp.exp(e)
    alpha = p / jnp.sum(p, axis=1, keepdims=True)        # softmax over source nodes
    return jnp.dot(alpha, h, preferred_element_type=jnp.float32) + bias


def _channel_attention_fused(x, w1, w2):
    # x: (N, C); fused CBAM: run avg-pool and max-pool through the shared MLP
    # as one (2, C) matmul pair instead of two separate MLP passes.
    avg = jnp.mean(x, axis=0, keepdims=True)             # (1, C)
    mx = jnp.max(x, axis=0, keepdims=True)               # (1, C)
    am = jnp.concatenate([avg, mx], axis=0)              # (2, C)
    hid = jnp.maximum(jnp.dot(am, w1, preferred_element_type=jnp.float32), 0.0)
    z = jnp.dot(hid, w2, preferred_element_type=jnp.float32)   # (2, C)
    scale = jax.nn.sigmoid(z[0:1, :] + z[1:2, :])        # (1, C)
    return x * scale


# ---------------------------------------------------------------------------
# the Pallas kernel: one graph per grid step, parameters resident in VMEM
# ---------------------------------------------------------------------------
def residual_gat_kernel(x_ref, adj_ref, p_ref, out_ref):
    x = x_ref[...]                                       # (N, F)
    adj = adj_ref[...]                                   # (N, N)
    p = p_ref[...]                                       # (P_ROWS, P_COLS)

    w1_ext = p[_R_W1:_R_W1 + F, 0:C + 3]
    w2_ext = p[_R_W2:_R_W2 + C, 0:C + 2]
    b1 = p[_R_B1:_R_B1 + 1, 0:C]
    b2 = p[_R_B2:_R_B2 + 1, 0:C]
    ca1_w1 = p[_R_CA1W1:_R_CA1W1 + C, 0:CR]
    ca1_w2 = p[_R_CA1W2:_R_CA1W2 + CR, 0:C]
    ca2_w1 = p[_R_CA2W1:_R_CA2W1 + C, 0:CR]
    ca2_w2 = p[_R_CA2W2:_R_CA2W2 + CR, 0:C]
    wfc = p[_R_WFC:_R_WFC + C, 0:1]
    bias_total = p[_R_BIAS:_R_BIAS + 1, 0:1]

    # conv1: one matmul produces h, both attention scores, and the residual
    # head contribution (x @ wres @ wfc) as extra columns.
    hs = jnp.dot(x, w1_ext, preferred_element_type=jnp.float32)      # (N, C+3)
    h = _gat_aggregate(hs[:, 0:C], hs[:, C:C + 1], hs[:, C + 1:C + 2], adj, b1)
    h = jnp.maximum(h, 0.0)
    h = _channel_attention_fused(h, ca1_w1, ca1_w2)
    r_contrib = hs[:, C + 2:C + 3]                                   # (N, 1)

    # conv2: one matmul produces h and both attention scores.
    hs2 = jnp.dot(h, w2_ext, preferred_element_type=jnp.float32)     # (N, C+2)
    h2 = _gat_aggregate(hs2[:, 0:C], hs2[:, C:C + 1], hs2[:, C + 1:C + 2], adj, b2)
    h2 = jnp.maximum(h2, 0.0)
    h2 = _channel_attention_fused(h2, ca2_w1, ca2_w2)

    # final head: (h2 + res_fc(x)) @ wfc + bfc  ==  h2@wfc + x@(wres@wfc) + (bres@wfc + bfc)
    logits = jnp.dot(h2, wfc, preferred_element_type=jnp.float32) + r_contrib + bias_total
    out_ref[...] = jax.nn.sigmoid(logits)


def residual_gat_forward(x, adj, params):
    """x: (B, N, F), adj: (B, N, N) dense mask with self-loops."""
    B = x.shape[0]
    slab = pack_params(params)
    return pl.pallas_call(
        residual_gat_kernel,
        out_shape=jax.ShapeDtypeStruct((B, N, 1), jnp.float32),
        grid=(B,),
        in_specs=[
            pl.BlockSpec((None, N, F), lambda b: (b, 0, 0)),
            pl.BlockSpec((None, N, N), lambda b: (b, 0, 0)),
            pl.BlockSpec((P_ROWS, P_COLS), lambda b: (0, 0)),   # resident weights
        ],
        out_specs=pl.BlockSpec((None, N, 1), lambda b: (b, 0, 0)),
        compiler_params=pltpu.CompilerParams(
            dimension_semantics=("parallel",)),
    )(x, adj, slab)


# ---------------------------------------------------------------------------
# pure-JAX reference (original, un-folded math) for a sanity check
# ---------------------------------------------------------------------------
def _ref_gat_layer(x, adj, w, a_src, a_dst, bias):
    h = jnp.dot(x, w)
    s_src = jnp.dot(h, a_src)
    s_dst = jnp.dot(h, a_dst)
    e = s_dst + s_src.T
    e = jnp.where(e > 0, e, NEG_SLOPE * e)
    e = jnp.where(adj > 0, e, -1e30)
    e = e - jnp.max(e, axis=1, keepdims=True)
    p = jnp.exp(e)
    alpha = p / jnp.sum(p, axis=1, keepdims=True)
    return jnp.dot(alpha, h) + bias


def _ref_channel_attention(x, w1, w2):
    def mlp(v):
        return jnp.dot(jnp.maximum(jnp.dot(v, w1), 0.0), w2)
    avg = jnp.mean(x, axis=0, keepdims=True)
    mx = jnp.max(x, axis=0, keepdims=True)
    return x * jax.nn.sigmoid(mlp(avg) + mlp(mx))


def residual_gat_reference(x, adj, params):
    (w1, a_src1, a_dst1, b1, ca1_w1, ca1_w2,
     w2, a_src2, a_dst2, b2, ca2_w1, ca2_w2,
     wres, bres, wfc, bfc) = params
    residual = x
    h = _ref_gat_layer(x, adj, w1, a_src1, a_dst1, b1)
    h = jnp.maximum(h, 0.0)
    h = _ref_channel_attention(h, ca1_w1, ca1_w2)
    h = _ref_gat_layer(h, adj, w2, a_src2, a_dst2, b2)
    h = jnp.maximum(h, 0.0)
    h = _ref_channel_attention(h, ca2_w1, ca2_w2)
    res = jnp.dot(residual, wres) + bres
    return jax.nn.sigmoid(jnp.dot(h + res, wfc) + bfc)


if __name__ == "__main__":
    key = jax.random.PRNGKey(0)
    keys = jax.random.split(key, 24)

    B = 8          # graphs per batched call
    n_edges = 40   # random edges per graph

    # node features for B graphs
    x = jax.random.normal(keys[0], (B, N, F), dtype=jnp.float32)

    # per-graph random edge_index -> dense adjacency mask with self-loops
    src = jax.random.randint(keys[1], (B, n_edges), 0, N)
    dst = jax.random.randint(keys[2], (B, n_edges), 0, N)
    batch_idx = jnp.arange(B)[:, None]
    adj = jnp.zeros((B, N, N), dtype=jnp.float32).at[batch_idx, dst, src].set(1.0)
    adj = jnp.maximum(adj, jnp.eye(N, dtype=jnp.float32)[None, :, :])

    s = 0.1
    params = [
        s * jax.random.normal(keys[3], (F, C), dtype=jnp.float32),    # conv1 W
        s * jax.random.normal(keys[4], (C, 1), dtype=jnp.float32),    # conv1 a_src
        s * jax.random.normal(keys[5], (C, 1), dtype=jnp.float32),    # conv1 a_dst
        s * jax.random.normal(keys[6], (1, C), dtype=jnp.float32),    # conv1 bias
        s * jax.random.normal(keys[7], (C, CR), dtype=jnp.float32),   # ca1 mlp w1
        s * jax.random.normal(keys[8], (CR, C), dtype=jnp.float32),   # ca1 mlp w2
        s * jax.random.normal(keys[9], (C, C), dtype=jnp.float32),    # conv2 W
        s * jax.random.normal(keys[10], (C, 1), dtype=jnp.float32),   # conv2 a_src
        s * jax.random.normal(keys[11], (C, 1), dtype=jnp.float32),   # conv2 a_dst
        s * jax.random.normal(keys[12], (1, C), dtype=jnp.float32),   # conv2 bias
        s * jax.random.normal(keys[13], (C, CR), dtype=jnp.float32),  # ca2 mlp w1
        s * jax.random.normal(keys[14], (CR, C), dtype=jnp.float32),  # ca2 mlp w2
        s * jax.random.normal(keys[15], (F, C), dtype=jnp.float32),   # res_fc W
        s * jax.random.normal(keys[16], (1, C), dtype=jnp.float32),   # res_fc bias
        s * jax.random.normal(keys[17], (C, 1), dtype=jnp.float32),   # fc W
        s * jax.random.normal(keys[18], (1, 1), dtype=jnp.float32),   # fc bias
    ]

    out = residual_gat_forward(x, adj, params)
    out = jax.block_until_ready(out)

    ref = jax.vmap(lambda xb, ab: residual_gat_reference(xb, ab, params))(x, adj)
    assert out.shape == (B, N, 1)
    assert jnp.allclose(out, ref, atol=1e-5, rtol=1e-5), "mismatch vs reference"

    print("KERNEL_OK")
</pallas_src>

<mosaic_0001>
module attributes {stable_mosaic.version = 11 : i64} {
  func.func @residual_gat_kernel(%arg0: i32, %arg1: memref<1x16x8xf32, #tpu.memory_space<vmem>>, %arg2: memref<1x16x16xf32, #tpu.memory_space<vmem>>, %arg3: memref<40x8xf32, #tpu.memory_space<vmem>>, %arg4: memref<1x16x1xf32, #tpu.memory_space<vmem>>) attributes {dimension_semantics = [#tpu.dimension_semantics<parallel>], iteration_bounds = array<i64: 8>, scalar_prefetch = 0 : i64, scratch_operands = 0 : i64, tpu.core_type = #tpu.core_type<tc>, window_params = [{transform_indices = @transform_0, window_bounds = array<i64: 1, 16, 8>}, {transform_indices = @transform_1, window_bounds = array<i64: 1, 16, 16>}, {pipeline_mode = #tpu.pipeline_mode<synchronous>, transform_indices = @transform_2, window_bounds = array<i64: 40, 8>}, {transform_indices = @transform_3, window_bounds = array<i64: 1, 16, 1>}]} {
    %c0 = arith.constant 0 : index
    %c0_0 = arith.constant 0 : index
    %c0_1 = arith.constant 0 : index
    %0 = vector.load %arg1[%c0, %c0_0, %c0_1] : memref<1x16x8xf32, #tpu.memory_space<vmem>>, vector<1x16x8xf32>
    %1 = vector.shape_cast %0 : vector<1x16x8xf32> to vector<16x8xf32>
    %c0_2 = arith.constant 0 : index
    %c0_3 = arith.constant 0 : index
    %c0_4 = arith.constant 0 : index
    %2 = vector.load %arg2[%c0_2, %c0_3, %c0_4] : memref<1x16x16xf32, #tpu.memory_space<vmem>>, vector<1x16x16xf32>
    %3 = vector.shape_cast %2 : vector<1x16x16xf32> to vector<16x16xf32>
    %c0_5 = arith.constant 0 : index
    %c0_6 = arith.constant 0 : index
    %4 = vector.load %arg3[%c0_5, %c0_6] : memref<40x8xf32, #tpu.memory_space<vmem>>, vector<40x8xf32>
    %5 = vector.extract_strided_slice %4 {offsets = [0, 0], sizes = [8, 7], strides = [1, 1]} : vector<40x8xf32> to vector<8x7xf32>
    %6 = vector.extract_strided_slice %4 {offsets = [8, 0], sizes = [4, 6], strides = [1, 1]} : vector<40x8xf32> to vector<4x6xf32>
    %7 = vector.extract_strided_slice %4 {offsets = [12, 0], sizes = [1, 4], strides = [1, 1]} : vector<40x8xf32> to vector<1x4xf32>
    %8 = vector.extract_strided_slice %4 {offsets = [13, 0], sizes = [1, 4], strides = [1, 1]} : vector<40x8xf32> to vector<1x4xf32>
    %9 = vector.extract_strided_slice %4 {offsets = [14, 0], sizes = [4, 2], strides = [1, 1]} : vector<40x8xf32> to vector<4x2xf32>
    %10 = vector.extract_strided_slice %4 {offsets = [18, 0], sizes = [2, 4], strides = [1, 1]} : vector<40x8xf32> to vector<2x4xf32>
    %11 = vector.extract_strided_slice %4 {offsets = [20, 0], sizes = [4, 2], strides = [1, 1]} : vector<40x8xf32> to vector<4x2xf32>
    %12 = vector.extract_strided_slice %4 {offsets = [24, 0], sizes = [2, 4], strides = [1, 1]} : vector<40x8xf32> to vector<2x4xf32>
    %13 = vector.extract_strided_slice %4 {offsets = [28, 0], sizes = [4, 1], strides = [1, 1]} : vector<40x8xf32> to vector<4x1xf32>
    %14 = vector.extract_strided_slice %4 {offsets = [32, 0], sizes = [1, 1], strides = [1, 1]} : vector<40x8xf32> to vector<1x1xf32>
    %cst = arith.constant dense<0.000000e+00> : vector<16x7xf32>
    %15 = tpu.matmul %1, %5, %cst {dimension_numbers = #tpu.dot_dimension_numbers<[1], [0], [0], [1], [0, 0, 1, 1], [], []>} : vector<16x8xf32>, vector<8x7xf32>, vector<16x7xf32> -> vector<16x7xf32>
    %16 = vector.extract_strided_slice %15 {offsets = [0, 0], sizes = [16, 4], strides = [1, 1]} : vector<16x7xf32> to vector<16x4xf32>
    %17 = vector.extract_strided_slice %15 {offsets = [0, 4], sizes = [16, 1], strides = [1, 1]} : vector<16x7xf32> to vector<16x1xf32>
    %18 = vector.extract_strided_slice %15 {offsets = [0, 5], sizes = [16, 1], strides = [1, 1]} : vector<16x7xf32> to vector<16x1xf32>
    %19 = tpu.transpose %18, [1, 0] : vector<16x1xf32> -> vector<1x16xf32>
    %20 = vector.broadcast %17 : vector<16x1xf32> to vector<16x16xf32>
    %21 = vector.broadcast %19 : vector<1x16xf32> to vector<16x16xf32>
    %22 = arith.addf %20, %21 : vector<16x16xf32>
    %cst_7 = arith.constant 0.000000e+00 : f32
    %23 = vector.broadcast %cst_7 : f32 to vector<16x16xf32>
    %24 = arith.cmpf ogt, %22, %23 : vector<16x16xf32>
    %cst_8 = arith.constant 2.000000e-01 : f32
    %25 = vector.broadcast %cst_8 : f32 to vector<16x16xf32>
    %26 = arith.mulf %25, %22 : vector<16x16xf32>
    %27 = arith.select %24, %22, %26 : vector<16x16xi1>, vector<16x16xf32>
    %cst_9 = arith.constant 0.000000e+00 : f32
    %28 = vector.broadcast %cst_9 : f32 to vector<16x16xf32>
    %29 = arith.cmpf ogt, %3, %28 : vector<16x16xf32>
    %cst_10 = arith.constant -1.000000e+30 : f32
    %30 = vector.broadcast %cst_10 : f32 to vector<16x16xf32>
    %31 = arith.select %29, %27, %30 : vector<16x16xi1>, vector<16x16xf32>
    %cst_11 = arith.constant dense<0xFF800000> : vector<16xf32>
    %32 = vector.multi_reduction <maximumf>, %31, %cst_11 [1] : vector<16x16xf32> to vector<16xf32>
    %33 = vector.shape_cast %32 : vector<16xf32> to vector<16x1xf32>
    %34 = vector.broadcast %33 : vector<16x1xf32> to vector<16x16xf32>
    %35 = arith.subf %31, %34 : vector<16x16xf32>
    %36 = math.exp %35 : vector<16x16xf32>
    %cst_12 = arith.constant dense<0.000000e+00> : vector<16xf32>
    %37 = vector.multi_reduction <add>, %36, %cst_12 [1] : vector<16x16xf32> to vector<16xf32>
    %38 = vector.shape_cast %37 : vector<16xf32> to vector<16x1xf32>
    %39 = vector.broadcast %38 : vector<16x1xf32> to vector<16x16xf32>
    %40 = arith.divf %36, %39 : vector<16x16xf32>
    %cst_13 = arith.constant dense<0.000000e+00> : vector<16x4xf32>
    %41 = tpu.matmul %40, %16, %cst_13 {dimension_numbers = #tpu.dot_dimension_numbers<[1], [0], [0], [1], [0, 0, 1, 1], [], []>} : vector<16x16xf32>, vector<16x4xf32>, vector<16x4xf32> -> vector<16x4xf32>
    %42 = vector.broadcast %7 : vector<1x4xf32> to vector<16x4xf32>
    %43 = arith.addf %41, %42 : vector<16x4xf32>
    %cst_14 = arith.constant 0.000000e+00 : f32
    %44 = vector.broadcast %cst_14 : f32 to vector<16x4xf32>
    %45 = arith.maximumf %43, %44 : vector<16x4xf32>
    %cst_15 = arith.constant dense<0.000000e+00> : vector<4xf32>
    %46 = vector.multi_reduction <add>, %45, %cst_15 [0] : vector<16x4xf32> to vector<4xf32>
    %47 = vector.shape_cast %46 : vector<4xf32> to vector<1x4xf32>
    %cst_16 = arith.constant 1.600000e+01 : f32
    %48 = vector.broadcast %cst_16 : f32 to vector<1x4xf32>
    %49 = arith.divf %47, %48 : vector<1x4xf32>
    %cst_17 = arith.constant dense<0xFF800000> : vector<4xf32>
    %50 = vector.multi_reduction <maximumf>, %45, %cst_17 [0] : vector<16x4xf32> to vector<4xf32>
    %51 = vector.shape_cast %50 : vector<4xf32> to vector<1x4xf32>
    %52 = tpu.concatenate %49, %51 in 0 : vector<1x4xf32>, vector<1x4xf32> -> vector<2x4xf32>
    %cst_18 = arith.constant dense<0.000000e+00> : vector<2x2xf32>
    %53 = tpu.matmul %52, %9, %cst_18 {dimension_numbers = #tpu.dot_dimension_numbers<[1], [0], [0], [1], [0, 0, 1, 1], [], []>} : vector<2x4xf32>, vector<4x2xf32>, vector<2x2xf32> -> vector<2x2xf32>
    %cst_19 = arith.constant 0.000000e+00 : f32
    %54 = vector.broadcast %cst_19 : f32 to vector<2x2xf32>
    %55 = arith.maximumf %53, %54 : vector<2x2xf32>
    %cst_20 = arith.constant dense<0.000000e+00> : vector<2x4xf32>
    %56 = tpu.matmul %55, %10, %cst_20 {dimension_numbers = #tpu.dot_dimension_numbers<[1], [0], [0], [1], [0, 0, 1, 1], [], []>} : vector<2x2xf32>, vector<2x4xf32>, vector<2x4xf32> -> vector<2x4xf32>
    %57 = vector.extract_strided_slice %56 {offsets = [0, 0], sizes = [1, 4], strides = [1, 1]} : vector<2x4xf32> to vector<1x4xf32>
    %58 = vector.extract_strided_slice %56 {offsets = [1, 0], sizes = [1, 4], strides = [1, 1]} : vector<2x4xf32> to vector<1x4xf32>
    %59 = arith.addf %57, %58 : vector<1x4xf32>
    %60 = arith.negf %59 : vector<1x4xf32>
    %61 = math.exp %60 : vector<1x4xf32>
    %cst_21 = arith.constant 1.000000e+00 : f32
    %62 = vector.broadcast %cst_21 : f32 to vector<1x4xf32>
    %63 = arith.addf %62, %61 : vector<1x4xf32>
    %64 = arith.divf %62, %63 : vector<1x4xf32>
    %65 = vector.broadcast %64 : vector<1x4xf32> to vector<16x4xf32>
    %66 = arith.mulf %45, %65 : vector<16x4xf32>
    %67 = vector.extract_strided_slice %15 {offsets = [0, 6], sizes = [16, 1], strides = [1, 1]} : vector<16x7xf32> to vector<16x1xf32>
    %cst_22 = arith.constant dense<0.000000e+00> : vector<16x6xf32>
    %68 = tpu.matmul %66, %6, %cst_22 {dimension_numbers = #tpu.dot_dimension_numbers<[1], [0], [0], [1], [0, 0, 1, 1], [], []>} : vector<16x4xf32>, vector<4x6xf32>, vector<16x6xf32> -> vector<16x6xf32>
    %69 = vector.extract_strided_slice %68 {offsets = [0, 0], sizes = [16, 4], strides = [1, 1]} : vector<16x6xf32> to vector<16x4xf32>
    %70 = vector.extract_strided_slice %68 {offsets = [0, 4], sizes = [16, 1], strides = [1, 1]} : vector<16x6xf32> to vector<16x1xf32>
    %71 = vector.extract_strided_slice %68 {offsets = [0, 5], sizes = [16, 1], strides = [1, 1]} : vector<16x6xf32> to vector<16x1xf32>
    %72 = tpu.transpose %71, [1, 0] : vector<16x1xf32> -> vector<1x16xf32>
    %73 = vector.broadcast %70 : vector<16x1xf32> to vector<16x16xf32>
    %74 = vector.broadcast %72 : vector<1x16xf32> to vector<16x16xf32>
    %75 = arith.addf %73, %74 : vector<16x16xf32>
    %cst_23 = arith.constant 0.000000e+00 : f32
    %76 = vector.broadcast %cst_23 : f32 to vector<16x16xf32>
    %77 = arith.cmpf ogt, %75, %76 : vector<16x16xf32>
    %cst_24 = arith.constant 2.000000e-01 : f32
    %78 = vector.broadcast %cst_24 : f32 to vector<16x16xf32>
    %79 = arith.mulf %78, %75 : vector<16x16xf32>
    %80 = arith.select %77, %75, %79 : vector<16x16xi1>, vector<16x16xf32>
    %cst_25 = arith.constant 0.000000e+00 : f32
    %81 = vector.broadcast %cst_25 : f32 to vector<16x16xf32>
    %82 = arith.cmpf ogt, %3, %81 : vector<16x16xf32>
    %cst_26 = arith.constant -1.000000e+30 : f32
    %83 = vector.broadcast %cst_26 : f32 to vector<16x16xf32>
    %84 = arith.select %82, %80, %83 : vector<16x16xi1>, vector<16x16xf32>
    %cst_27 = arith.constant dense<0xFF800000> : vector<16xf32>
    %85 = vector.multi_reduction <maximumf>, %84, %cst_27 [1] : vector<16x16xf32> to vector<16xf32>
    %86 = vector.shape_cast %85 : vector<16xf32> to vector<16x1xf32>
    %87 = vector.broadcast %86 : vector<16x1xf32> to vector<16x16xf32>
    %88 = arith.subf %84, %87 : vector<16x16xf32>
    %89 = math.exp %88 : vector<16x16xf32>
    %cst_28 = arith.constant dense<0.000000e+00> : vector<16xf32>
    %90 = vector.multi_reduction <add>, %89, %cst_28 [1] : vector<16x16xf32> to vector<16xf32>
    %91 = vector.shape_cast %90 : vector<16xf32> to vector<16x1xf32>
    %92 = vector.broadcast %91 : vector<16x1xf32> to vector<16x16xf32>
    %93 = arith.divf %89, %92 : vector<16x16xf32>
    %cst_29 = arith.constant dense<0.000000e+00> : vector<16x4xf32>
    %94 = tpu.matmul %93, %69, %cst_29 {dimension_numbers = #tpu.dot_dimension_numbers<[1], [0], [0], [1], [0, 0, 1, 1], [], []>} : vector<16x16xf32>, vector<16x4xf32>, vector<16x4xf32> -> vector<16x4xf32>
    %95 = vector.broadcast %8 : vector<1x4xf32> to vector<16x4xf32>
    %96 = arith.addf %94, %95 : vector<16x4xf32>
    %cst_30 = arith.constant 0.000000e+00 : f32
    %97 = vector.broadcast %cst_30 : f32 to vector<16x4xf32>
    %98 = arith.maximumf %96, %97 : vector<16x4xf32>
    %cst_31 = arith.constant dense<0.000000e+00> : vector<4xf32>
    %99 = vector.multi_reduction <add>, %98, %cst_31 [0] : vector<16x4xf32> to vector<4xf32>
    %100 = vector.shape_cast %99 : vector<4xf32> to vector<1x4xf32>
    %cst_32 = arith.constant 1.600000e+01 : f32
    %101 = vector.broadcast %cst_32 : f32 to vector<1x4xf32>
    %102 = arith.divf %100, %101 : vector<1x4xf32>
    %cst_33 = arith.constant dense<0xFF800000> : vector<4xf32>
    %103 = vector.multi_reduction <maximumf>, %98, %cst_33 [0] : vector<16x4xf32> to vector<4xf32>
    %104 = vector.shape_cast %103 : vector<4xf32> to vector<1x4xf32>
    %105 = tpu.concatenate %102, %104 in 0 : vector<1x4xf32>, vector<1x4xf32> -> vector<2x4xf32>
    %cst_34 = arith.constant dense<0.000000e+00> : vector<2x2xf32>
    %106 = tpu.matmul %105, %11, %cst_34 {dimension_numbers = #tpu.dot_dimension_numbers<[1], [0], [0], [1], [0, 0, 1, 1], [], []>} : vector<2x4xf32>, vector<4x2xf32>, vector<2x2xf32> -> vector<2x2xf32>
    %cst_35 = arith.constant 0.000000e+00 : f32
    %107 = vector.broadcast %cst_35 : f32 to vector<2x2xf32>
    %108 = arith.maximumf %106, %107 : vector<2x2xf32>
    %cst_36 = arith.constant dense<0.000000e+00> : vector<2x4xf32>
    %109 = tpu.matmul %108, %12, %cst_36 {dimension_numbers = #tpu.dot_dimension_numbers<[1], [0], [0], [1], [0, 0, 1, 1], [], []>} : vector<2x2xf32>, vector<2x4xf32>, vector<2x4xf32> -> vector<2x4xf32>
    %110 = vector.extract_strided_slice %109 {offsets = [0, 0], sizes = [1, 4], strides = [1, 1]} : vector<2x4xf32> to vector<1x4xf32>
    %111 = vector.extract_strided_slice %109 {offsets = [1, 0], sizes = [1, 4], strides = [1, 1]} : vector<2x4xf32> to vector<1x4xf32>
    %112 = arith.addf %110, %111 : vector<1x4xf32>
    %113 = arith.negf %112 : vector<1x4xf32>
    %114 = math.exp %113 : vector<1x4xf32>
    %cst_37 = arith.constant 1.000000e+00 : f32
    %115 = vector.broadcast %cst_37 : f32 to vector<1x4xf32>
    %116 = arith.addf %115, %114 : vector<1x4xf32>
    %117 = arith.divf %115, %116 : vector<1x4xf32>
    %118 = vector.broadcast %117 : vector<1x4xf32> to vector<16x4xf32>
    %119 = arith.mulf %98, %118 : vector<16x4xf32>
    %cst_38 = arith.constant dense<0.000000e+00> : vector<16x1xf32>
    %120 = tpu.matmul %119, %13, %cst_38 {dimension_numbers = #tpu.dot_dimension_numbers<[1], [0], [0], [1], [0, 0, 1, 1], [], []>} : vector<16x4xf32>, vector<4x1xf32>, vector<16x1xf32> -> vector<16x1xf32>
    %121 = arith.addf %120, %67 : vector<16x1xf32>
    %122 = vector.broadcast %14 : vector<1x1xf32> to vector<16x1xf32>
    %123 = arith.addf %121, %122 : vector<16x1xf32>
    %124 = arith.negf %123 : vector<16x1xf32>
    %125 = math.exp %124 : vector<16x1xf32>
    %cst_39 = arith.constant 1.000000e+00 : f32
    %126 = vector.broadcast %cst_39 : f32 to vector<16x1xf32>
    %127 = arith.addf %126, %125 : vector<16x1xf32>
    %128 = arith.divf %126, %127 : vector<16x1xf32>
    %c0_40 = arith.constant 0 : index
    %c0_41 = arith.constant 0 : index
    %c0_42 = arith.constant 0 : index
    %129 = vector.load %arg4[%c0_40, %c0_41, %c0_42] : memref<1x16x1xf32, #tpu.memory_space<vmem>>, vector<1x16x1xf32>
    %130 = vector.shape_cast %129 : vector<1x16x1xf32> to vector<16x1xf32>
    %131 = vector.shape_cast %128 : vector<16x1xf32> to vector<1x16x1xf32>
    tpu.vector_store %arg4[%c0_40, %c0_41, %c0_42], %131 {strides = array<i32>} : memref<1x16x1xf32, #tpu.memory_space<vmem>>, vector<1x16x1xf32>,
    return
  }
  func.func @transform_0(%arg0: i32) -> (i32, i32, i32) {
    %c0_i32 = arith.constant 0 : i32
    %c0_i32_0 = arith.constant 0 : i32
    %c0_i32_1 = arith.constant 0 : i32
    return %arg0, %c0_i32, %c0_i32_0 : i32, i32, i32
  }
  func.func @transform_1(%arg0: i32) -> (i32, i32, i32) {
    %c0_i32 = arith.constant 0 : i32
    %c0_i32_0 = arith.constant 0 : i32
    %c0_i32_1 = arith.constant 0 : i32
    return %arg0, %c0_i32, %c0_i32_0 : i32, i32, i32
  }
  func.func @transform_2(%arg0: i32) -> (i32, i32) {
    %c0_i32 = arith.constant 0 : i32
    %c0_i32_0 = arith.constant 0 : i32
    %c0_i32_1 = arith.constant 0 : i32
    return %c0_i32, %c0_i32_0 : i32, i32
  }
  func.func @transform_3(%arg0: i32) -> (i32, i32, i32) {
    %c0_i32 = arith.constant 0 : i32
    %c0_i32_0 = arith.constant 0 : i32
    %c0_i32_1 = arith.constant 0 : i32
    return %arg0, %c0_i32, %c0_i32_0 : i32, i32, i32
  }
}

</mosaic_0001>

<llo_original>
// kernel: tpu_custom_call.1
$region0: #{tpu_custom_call.1}
  #allocation0 [shape = 'u32[]', space=smem, size = 0x4, offset = 0x4, fixed_abs, tag = 'smem constant byte address 0x4 - core index']
  #allocation1 [shape = 'u32[144,128]{1,0:T(1,128)}', space=vmem, size = 0x12000, scoped, tag = 'internal scratch']
  %s0 = inlined_call_operand.vmem [shape: f32[8,16,8], index: 0, kind: input, shape index: {}]
  %s1 = inlined_call_operand.vmem [shape: f32[8,16,16], index: 1, kind: input, shape index: {}]
  %s2 = inlined_call_operand.vmem [shape: f32[40,8], index: 2, kind: input, shape index: {}]
  %s3 = inlined_call_operand.vmem [shape: f32[8,16,1], index: 3, kind: output, shape index: {}]
  %s4 = sld [smem:[#allocation0]]
  $region45: #{tpu_custom_call.1} parent=0
    _
  %s6 = ssub.s32 1, %s4
  %s7 = scalar_select 0, %s6, %s4
  loop: start=0, step=1, limit=10
  $region2: #{tpu_custom_call.1} parent=0 // loop_pre_header
    _
  $region3: #{tpu_custom_call.1} parent=0 // loop_header
    %s9 = sphi 0, %s13
    %p10 = scmp.ge.s32.totalorder %s9, 10
    %s19 = sphi 0, %s21
    %s22 = sphi 0, %s19
    %s23 = sphi 0, %s22
    %s39 = sphi 0, %s23
    %s45 = sphi 0, %s47
    %s48 = sphi 0, %s45
    %s49 = sphi 0, %s48
    %s65 = sphi 0, %s49
    %s69 = sphi 0, %s69
    %s71 = sphi 0, %s69
    %s72 = sphi 0, %s71
    %s86 = sphi 0, %s72
    %s92 = sphi 0, %s94
    %s95 = sphi 0, %s92
    %s96 = sphi 0, %s95
    %s112 = sphi 0, %s96
  $region4: #{tpu_custom_call.1} parent=0 // loop_header_branch
    %12 = sbr.rel (%p10) target = $region8
  $region5: #{tpu_custom_call.1} parent=0 // loop_body
    %s14 = ssub.s32 %s9, 1
    %s15 = ssub.s32 %s9, 2
    %s16 = sadd.s32 %s9, 1
    %s17 = ssub.s32 %s9, %s16
    %p18 = scmp.eq.s32.totalorder %s17, 0
    %s20 = sadd.s32 %s19, 1
    %s21 = scalar_select %p18, %s19, %s20
    %p24 = pneg %p18
    %p25 = scmp.eq.s32.totalorder %s9, 7
    %p26 = por %p24, %p25
    %p27 = scmp.ne.s32.totalorder %s19, %s22
    %p28 = scmp.eq.s32.totalorder %s9, 0
    %p29 = por %p27, %p28
    %p30 = scmp.ne.s32.totalorder %s19, %s22
    %p31 = scmp.eq.s32.totalorder %s14, 7
    %p32 = por %p30, %p31
    %p33 = scmp.ne.s32.totalorder %s22, %s23
    %p34 = scmp.eq.s32.totalorder %s14, 0
    %p35 = por %p33, %p34
    %p36 = scmp.ne.s32.totalorder %s22, %s23
    %p37 = scmp.eq.s32.totalorder %s15, 7
    %p38 = por %p36, %p37
    %p40 = scmp.ne.s32.totalorder %s23, %s39
    %p41 = scmp.eq.s32.totalorder %s15, 0
    %p42 = por %p40, %p41
    %s43 = ssub.s32 %s9, %s16
    %p44 = scmp.eq.s32.totalorder %s43, 0
    %s46 = sadd.s32 %s45, 1
    %s47 = scalar_select %p44, %s45, %s46
    %p50 = pneg %p44
    %p51 = scmp.eq.s32.totalorder %s9, 7
    %p52 = por %p50, %p51
    %p53 = scmp.ne.s32.totalorder %s45, %s48
    %p54 = scmp.eq.s32.totalorder %s9, 0
    %p55 = por %p53, %p54
    %p56 = scmp.ne.s32.totalorder %s45, %s48
    %p57 = scmp.eq.s32.totalorder %s14, 7
    %p58 = por %p56, %p57
    %p59 = scmp.ne.s32.totalorder %s48, %s49
    %p60 = scmp.eq.s32.totalorder %s14, 0
    %p61 = por %p59, %p60
    %p62 = scmp.ne.s32.totalorder %s48, %s49
    %p63 = scmp.eq.s32.totalorder %s15, 7
    %p64 = por %p62, %p63
    %p66 = scmp.ne.s32.totalorder %s49, %s65
    %p67 = scmp.eq.s32.totalorder %s15, 0
    %p68 = por %p66, %p67
    %s70 = sadd.s32 %s69, 1
    %p73 = scmp.eq.s32.totalorder %s9, 7
    %p74 = scmp.ne.s32.totalorder %s69, %s71
    %p75 = scmp.eq.s32.totalorder %s9, 0
    %p76 = por %p74, %p75
    %p77 = scmp.ne.s32.totalorder %s69, %s71
    %p78 = scmp.eq.s32.totalorder %s14, 7
    %p79 = por %p77, %p78
    %p80 = scmp.ne.s32.totalorder %s71, %s72
    %p81 = scmp.eq.s32.totalorder %s14, 0
    %p82 = por %p80, %p81
    %p83 = scmp.ne.s32.totalorder %s71, %s72
    %p84 = scmp.eq.s32.totalorder %s15, 7
    %p85 = por %p83, %p84
    %p87 = scmp.ne.s32.totalorder %s72, %s86
    %p88 = scmp.eq.s32.totalorder %s15, 0
    %p89 = por %p87, %p88
    %s90 = ssub.s32 %s9, %s16
    %p91 = scmp.eq.s32.totalorder %s90, 0
    %s93 = sadd.s32 %s92, 1
    %s94 = scalar_select %p91, %s92, %s93
    %p97 = pneg %p91
    %p98 = scmp.eq.s32.totalorder %s9, 7
    %p99 = por %p97, %p98
    %p100 = scmp.ne.s32.totalorder %s92, %s95
    %p101 = scmp.eq.s32.totalorder %s9, 0
    %p102 = por %p100, %p101
    %p103 = scmp.ne.s32.totalorder %s92, %s95
    %p104 = scmp.eq.s32.totalorder %s14, 7
    %p105 = por %p103, %p104
    %p106 = scmp.ne.s32.totalorder %s95, %s96
    %p107 = scmp.eq.s32.totalorder %s14, 0
    %p108 = por %p106, %p107
    %p109 = scmp.ne.s32.totalorder %s95, %s96
    %p110 = scmp.eq.s32.totalorder %s15, 7
    %p111 = por %p109, %p110
    %p113 = scmp.ne.s32.totalorder %s96, %s112
    %p114 = scmp.eq.s32.totalorder %s15, 0
    %p115 = por %p113, %p114
    %p116 = scmp.le.s32.totalorder 1, %s9
    %p117 = scmp.lt.s32.totalorder %s9, 9
    %p118 = pnand %p116, %p117
    %p119 = pneg %p118
    // Predicated region
    $region9: #{tpu_custom_call.1} parent=5 // pred_check
      _
    $region10: #{tpu_custom_call.1} parent=5 // pred_check_branch
      %121 = sbr.rel (%p118) target = $region12
    $region11: #{tpu_custom_call.1} parent=5 // pred_region
      %s122 = ssub.s32 %s9, 1
      // Predicated region
      $region13: #{tpu_custom_call.1} parent=11 // pred_check
        %p123 = pneg %p82
      $region14: #{tpu_custom_call.1} parent=11 // pred_check_branch
        %125 = sbr.rel (%p123) target = $region16
      $region15: #{tpu_custom_call.1} parent=11 // pred_region
        _
      $region16: #{tpu_custom_call.1} parent=11 // pred_fallthru
        _
    $region12: #{tpu_custom_call.1} parent=5 // pred_fallthru
      _
    %p126 = scmp.lt.s32.totalorder %s9, 8
    // Predicated region
    $region17: #{tpu_custom_call.1} parent=5 // pred_check
      %p127 = pneg %p126
    $region18: #{tpu_custom_call.1} parent=5 // pred_check_branch
      %129 = sbr.rel (%p127) target = $region20
    $region19: #{tpu_custom_call.1} parent=5 // pred_region
      // Predicated region
      $region21: #{tpu_custom_call.1} parent=19 // pred_check
        %p130 = pneg %p29
      $region22: #{tpu_custom_call.1} parent=19 // pred_check_branch
        %132 = sbr.rel (%p130) target = $region24
      $region23: #{tpu_custom_call.1} parent=19 // pred_region
        %p133 = scmp.lt.s32.totalorder %s9, 7
        %s134 = scalar_select %p133, %s9, 7
        %s135 = smul.addr %s134, 2
        %s136 = smul.addr %s135, 8
        %s137 = scalar_lea.vmem %s0, %s136
      $region24: #{tpu_custom_call.1} parent=19 // pred_fallthru
        _
      // Predicated region
      $region25: #{tpu_custom_call.1} parent=19 // pred_check
        %p138 = pneg %p55
      $region26: #{tpu_custom_call.1} parent=19 // pred_check_branch
        %140 = sbr.rel (%p138) target = $region28
      $region27: #{tpu_custom_call.1} parent=19 // pred_region
        %p141 = scmp.lt.s32.totalorder %s9, 7
        %s142 = scalar_select %p141, %s9, 7
        %s143 = smul.addr %s142, 2
        %s144 = smul.addr %s143, 8
        %s145 = scalar_lea.vmem %s1, %s144
      $region28: #{tpu_custom_call.1} parent=19 // pred_fallthru
        _
    $region20: #{tpu_custom_call.1} parent=5 // pred_fallthru
      _
    %p146 = scmp.le.s32.totalorder 1, %s9
    %p147 = scmp.lt.s32.totalorder %s9, 9
    %p148 = pnand %p146, %p147
    %p149 = pneg %p148
    // Predicated region
    $region29: #{tpu_custom_call.1} parent=5 // pred_check
      _
    $region30: #{tpu_custom_call.1} parent=5 // pred_check_branch
      %151 = sbr.rel (%p148) target = $region32
    $region31: #{tpu_custom_call.1} parent=5 // pred_region
      %s152 = ssub.s32 %s9, 1
      %p153 = scmp.lt.s32.totalorder %s14, 7
      %s154 = scalar_select %p153, %s14, 7
      %s155 = smul.addr %s154, 2
      %s156 = smul.addr %s155, 8
      %s157 = scalar_lea.vmem %s0, %s156
      %p158 = pneg %p35
      %p159 = pneg %p32
      %p160 = scmp.lt.s32.totalorder %s14, 7
      %s161 = scalar_select %p160, %s14, 7
      %s162 = smul.addr %s161, 2
      %s163 = smul.addr %s162, 8
      %s164 = scalar_lea.vmem %s1, %s163
      %p165 = pneg %p61
      %p166 = pneg %p58
      %p167 = pneg %p82
      %p168 = pneg %p79
      %p169 = pneg %p108
      %p170 = pneg %p105
      %p171 = scmp.lt.s32.totalorder %s14, 7
      %s172 = scalar_select %p171, %s14, 7
      %s173 = smul.addr %s172, 2
      %s174 = smul.addr %s173, 8
      %s175 = scalar_lea.vmem %s3, %s174
      %p176 = scmp.lt.s32.totalorder %s14, 7
      %s177 = scalar_select %p176, %s14, 7
      %s178 = smul.addr %s177, 2
      %s179 = smul.addr %s178, 8
      %s180 = scalar_lea.vmem %s0, %s179
      %p181 = scmp.lt.s32.totalorder %s14, 7
      %s182 = scalar_select %p181, %s14, 7
      %s183 = smul.addr %s182, 2
      %s184 = smul.addr %s183, 8
      %s185 = scalar_lea.vmem %s1, %s184
      %p186 = scmp.lt.s32.totalorder %s14, 7
      %s187 = scalar_select %p186, %s14, 7
      %s188 = smul.addr %s187, 2
      %s189 = smul.addr %s188, 8
      %s190 = scalar_lea.vmem %s3, %s189
      %v191 = vld [vmem:[%s180] sm:$0xff]
      %v192 = vld [vmem:[%s180 + $0x8] sm:$0xff]
      %v193 = vld [vmem:[%s185] sm:$0xff]
      %v194 = vld [vmem:[%s185 + $0x8] sm:$0xff]
      %v195 = vld [vmem:[%s2] sm:$0xff]
      %v196 = vld [vmem:[%s2 + $0x8] sm:$0xff]
      %v197 = vld [vmem:[%s2 + $0x10] sm:$0xff]
      %v198 = vld [vmem:[%s2 + $0x18] sm:$0xff]
      %v199 = vld [vmem:[%s2 + $0x20] sm:$0xff]
      %vm200 = vcmask 64512
      %v202 = vsel %vm200, %v191, 0
      %v205 = vsel %vm200, %v192, 0
      %207 = vmatprep.subr.mxu0 0.0
      %208 = vmatpush1.msra.mxu0 0.0
      %209 = vmatprep.subr.mxu0 0.0
      %210 = vmatpush1.msra.mxu0 0.0
      %211 = vmatprep.subr.mxu0 0.0
      %212 = vmatpush1.msra.mxu0 0.0
      %213 = vmatprep.subr.mxu0 0.0
      %214 = vmatpush1.msra.mxu0 0.0
      %215 = vmatprep.subr.mxu0 0.0
      %216 = vmatpush1.msra.mxu0 0.0
      %217 = vmatprep.subr.mxu0 0.0
      %218 = vmatpush1.msra.mxu0 0.0
      %219 = vmatprep.subr.mxu0 0.0
      %220 = vmatpush1.msra.mxu0 0.0
      %221 = vmatprep.subr.mxu0 0.0
      %222 = vmatpush1.msra.mxu0 0.0
      %223 = vmatprep.subr.mxu0 0.0
      %224 = vmatpush1.msra.mxu0 0.0
      %225 = vmatprep.subr.mxu0 0.0
      %226 = vmatpush1.msra.mxu0 0.0
      %227 = vmatprep.subr.mxu0 0.0
      %228 = vmatpush1.msra.mxu0 0.0
      %229 = vmatprep.subr.mxu0 0.0
      %230 = vmatpush1.msra.mxu0 0.0
      %231 = vmatprep.subr.mxu0 0.0
      %232 = vmatpush1.msra.mxu0 0.0
      %233 = vmatprep.subr.mxu0 0.0
      %234 = vmatpush1.msra.mxu0 0.0
      %235 = vmatprep.subr.mxu0 0.0
      %236 = vmatpush1.msra.mxu0 0.0
      %237 = vmatprep.subr.mxu0 0.0
      %238 = vmatpush1.msra.mxu0 %v195
      %239 = vmatprep.subr.mxu0 0.0
      %240 = vmatpush2.msra.mxu0 0.0
      %241 = vmatprep.subr.mxu0 0.0
      %242 = vmatpush2.msra.mxu0 0.0
      %243 = vmatprep.subr.mxu0 0.0
      %244 = vmatpush2.msra.mxu0 0.0
      %245 = vmatprep.subr.mxu0 0.0
      %246 = vmatpush2.msra.mxu0 0.0
      %247 = vmatprep.subr.mxu0 0.0
      %248 = vmatpush2.msra.mxu0 0.0
      %249 = vmatprep.subr.mxu0 0.0
      %250 = vmatpush2.msra.mxu0 0.0
      %251 = vmatprep.subr.mxu0 0.0
      %252 = vmatpush2.msra.mxu0 0.0
      %253 = vmatprep.subr.mxu0 0.0
      %254 = vmatpush2.msra.mxu0 0.0
      %255 = vmatprep.subr.mxu0 0.0
      %256 = vmatpush2.msra.mxu0 0.0
      %257 = vmatprep.subr.mxu0 0.0
      %258 = vmatpush2.msra.mxu0 0.0
      %259 = vmatprep.subr.mxu0 0.0
      %260 = vmatpush2.msra.mxu0 0.0
      %261 = vmatprep.subr.mxu0 0.0
      %262 = vmatpush2.msra.mxu0 0.0
      %263 = vmatprep.subr.mxu0 0.0
      %264 = vmatpush2.msra.mxu0 0.0
      %265 = vmatprep.subr.mxu0 0.0
      %266 = vmatpush2.msra.mxu0 0.0
      %267 = vmatprep.subr.mxu0 0.0
      %268 = vmatpush2.msra.mxu0 0.0
      %269 = vmatprep.subr.mxu0 0.0
      %270 = vmatpush2.msra.mxu0 0.0
      %271 = vmatprep.mubr.f32.mxu0 0.0
      %272 = vmatmul.mubr.f32.gmra.mxu0 %v202
      %v273 = vpop.f32.mrf.mxu0
      %v274 = vadd.f32 0.0, %v273
      %v275 = vpop.f32.mrf.mxu0
      %276 = vmatprep.mubr.f32.mxu0 0.0
      %277 = vmatmul.mubr.f32.gmra.mxu0 %v205
      %v278 = vpop.f32.mrf.mxu0
      %v279 = vadd.f32 0.0, %v278
      %v280 = vpop.f32.mrf.mxu0
      %281 = vdwg.mxu0
      %284 = vrot.lane.b32.xlu0 %v274, 123
      %v285 = vpop.permute.xlu0 %284
      %286 = vrot.lane.b32.xlu0 %v279, 123
      %v287 = vpop.permute.xlu0 %286
      %290 = vxpose.xlu0.b32.start [1/16] %v285, 128
      %291 = vxpose.xlu0.b32.cont [2/16] %v287, 128
      %292 = vxpose.xlu0.b32.cont [3/16] 0.0, 128
      %293 = vxpose.xlu0.b32.cont [4/16] 0.0, 128
      %294 = vxpose.xlu0.b32.cont [5/16] 0.0, 128
      %295 = vxpose.xlu0.b32.cont [6/16] 0.0, 128
      %296 = vxpose.xlu0.b32.cont [7/16] 0.0, 128
      %297 = vxpose.xlu0.b32.cont [8/16] 0.0, 128
      %298 = vxpose.xlu0.b32.cont [9/16] 0.0, 128
      %299 = vxpose.xlu0.b32.cont [10/16] 0.0, 128
      %300 = vxpose.xlu0.b32.cont [11/16] 0.0, 128
      %301 = vxpose.xlu0.b32.cont [12/16] 0.0, 128
      %302 = vxpose.xlu0.b32.cont [13/16] 0.0, 128
      %303 = vxpose.xlu0.b32.cont [14/16] 0.0, 128
      %304 = vxpose.xlu0.b32.cont [15/16] 0.0, 128
      %305 = vxpose.xlu0.b32.end [16/16] 0.0, 128
      %v306 = vpop.trf.xlu0
      %v307 = vpop.trf.xlu0
      %v308 = vpop.trf.xlu0
      %v309 = vpop.trf.xlu0
      %v310 = vpop.trf.xlu0
      %v311 = vpop.trf.xlu0
      %v312 = vpop.trf.xlu0
      %v313 = vpop.trf.xlu0
      %v314 = vpop.trf.xlu0
      %v315 = vpop.trf.xlu0
      %v316 = vpop.trf.xlu0
      %v317 = vpop.trf.xlu0
      %v318 = vpop.trf.xlu0
      %v319 = vpop.trf.xlu0
      %v320 = vpop.trf.xlu0
      %v321 = vpop.trf.xlu0
      %322 = vset.pattern.permute.xlu0 4
      %323 = vperm.xlu0 %322, %v274
      %v324 = vpop.permute.xlu0 %323
      %326 = vset.pattern.permute.xlu0 4
      %327 = vperm.xlu0 %326, %v279
      %v328 = vpop.permute.xlu0 %327
      %v330 = vlaneseq
      %v331 = vshrl.u32 %v330, 7
      %v332 = vsub.s32 0, %v331
      %v333 = vrot.slane %v306, %v332
      %v334 = vadd.f32 %v324, %v333
      %v335 = vadd.f32 %v328, %v333
      %vm336 = vcmp.gt.f32.partialorder %v334, 0.0
      %vm337 = vcmp.gt.f32.partialorder %v335, 0.0
      %v338 = vmul.f32 %v334, 0.2
      %v339 = vmul.f32 %v335, 0.2
      %v340 = vsel %vm336, %v334, %v338
      %v341 = vsel %vm337, %v335, %v339
      %vm342 = vcmp.gt.f32.partialorder %v193, 0.0
      %vm343 = vcmp.gt.f32.partialorder %v194, 0.0
      %v344 = vsel %vm342, %v340, -1e+30
      %v345 = vsel %vm343, %v341, -1e+30
      %vm346 = vcmask 130048
      %v347 = vsel %vm346, %v344, -inf
      %348 = vmax.xlane.f32.xlu0 %v347
      %v349 = vpop.xlane.xlu0 %348
      %v350 = vsel %vm346, %v345, -inf
      %351 = vmax.xlane.f32.xlu0 %v350
      %v352 = vpop.xlane.xlu0 %351
      %v353 = vsub.f32 %v344, %v349
      %v354 = vsub.f32 %v345, %v352
      %v355 = vmul.f32 %v353, 1.442695
      %v356 = vpow.pop %v355
      %v357 = vmul.f32 %v354, 1.442695
      %v358 = vpow.pop %v357
      %v359 = vsel %vm346, %v356, 0.0
      %360 = vadd.xlane.f32.xlu0 %v359
      %v361 = vpop.xlane.xlu0 %360
      %v362 = vsel %vm346, %v358, 0.0
      %363 = vadd.xlane.f32.xlu0 %v362
      %v364 = vpop.xlane.xlu0 %363
      %v365 = vrcp.pop %v361
      %v366 = vmul.f32 %v356, %v365
      %v367 = vrcp.pop %v364
      %v368 = vmul.f32 %v358, %v367
      %v369 = vlaneseq
      %v370 = vshrl.u32 %v369, 7
      %v371 = vsub.s32 4, %v370
      %v372 = vrot.slane %v196, %v371
      %v374 = vsel %vm346, %v366, 0
      %v377 = vsel %vm346, %v368, 0
      %379 = vmatprep.subr.mxu0 0.0
      %380 = vmatpush1.msra.mxu0 0.0
      %381 = vmatprep.subr.mxu0 0.0
      %382 = vmatpush1.msra.mxu0 0.0
      %383 = vmatprep.subr.mxu0 0.0
      %384 = vmatpush1.msra.mxu0 0.0
      %385 = vmatprep.subr.mxu0 0.0
      %386 = vmatpush1.msra.mxu0 0.0
      %387 = vmatprep.subr.mxu0 0.0
      %388 = vmatpush1.msra.mxu0 0.0
      %389 = vmatprep.subr.mxu0 0.0
      %390 = vmatpush1.msra.mxu0 0.0
      %391 = vmatprep.subr.mxu0 0.0
      %392 = vmatpush1.msra.mxu0 0.0
      %393 = vmatprep.subr.mxu0 0.0
      %394 = vmatpush1.msra.mxu0 0.0
      %395 = vmatprep.subr.mxu0 0.0
      %396 = vmatpush1.msra.mxu0 0.0
      %397 = vmatprep.subr.mxu0 0.0
      %398 = vmatpush1.msra.mxu0 0.0
      %399 = vmatprep.subr.mxu0 0.0
      %400 = vmatpush1.msra.mxu0 0.0
      %401 = vmatprep.subr.mxu0 0.0
      %402 = vmatpush1.msra.mxu0 0.0
      %403 = vmatprep.subr.mxu0 0.0
      %404 = vmatpush1.msra.mxu0 0.0
      %405 = vmatprep.subr.mxu0 0.0
      %406 = vmatpush1.msra.mxu0 0.0
      %407 = vmatprep.subr.mxu0 0.0
      %408 = vmatpush1.msra.mxu0 %v279
      %409 = vmatprep.subr.mxu0 0.0
      %410 = vmatpush1.msra.mxu0 %v274
      %411 = vmatprep.subr.mxu0 0.0
      %412 = vmatpush2.msra.mxu0 0.0
      %413 = vmatprep.subr.mxu0 0.0
      %414 = vmatpush2.msra.mxu0 0.0
      %415 = vmatprep.subr.mxu0 0.0
      %416 = vmatpush2.msra.mxu0 0.0
      %417 = vmatprep.subr.mxu0 0.0
      %418 = vmatpush2.msra.mxu0 0.0
      %419 = vmatprep.subr.mxu0 0.0
      %420 = vmatpush2.msra.mxu0 0.0
      %421 = vmatprep.subr.mxu0 0.0
      %422 = vmatpush2.msra.mxu0 0.0
      %423 = vmatprep.subr.mxu0 0.0
      %424 = vmatpush2.msra.mxu0 0.0
      %425 = vmatprep.subr.mxu0 0.0
      %426 = vmatpush2.msra.mxu0 0.0
      %427 = vmatprep.subr.mxu0 0.0
      %428 = vmatpush2.msra.mxu0 0.0
      %429 = vmatprep.subr.mxu0 0.0
      %430 = vmatpush2.msra.mxu0 0.0
      %431 = vmatprep.subr.mxu0 0.0
      %432 = vmatpush2.msra.mxu0 0.0
      %433 = vmatprep.subr.mxu0 0.0
      %434 = vmatpush2.msra.mxu0 0.0
      %435 = vmatprep.subr.mxu0 0.0
      %436 = vmatpush2.msra.mxu0 0.0
      %437 = vmatprep.subr.mxu0 0.0
      %438 = vmatpush2.msra.mxu0 0.0
      %439 = vmatprep.subr.mxu0 0.0
      %440 = vmatpush2.msra.mxu0 0.0
      %441 = vmatprep.subr.mxu0 0.0
      %442 = vmatpush2.msra.mxu0 0.0
      %443 = vmatprep.mubr.f32.mxu0 0.0
      %444 = vmatmul.mubr.f32.gmra.mxu0 %v374
      %v445 = vpop.f32.mrf.mxu0
      %v446 = vadd.f32 %v372, %v445
      %v447 = vpop.f32.mrf.mxu0
      %448 = vmatprep.mubr.f32.mxu0 0.0
      %449 = vmatmul.mubr.f32.gmra.mxu0 %v377
      %v450 = vpop.f32.mrf.mxu0
      %v451 = vadd.f32 %v372, %v450
      %v452 = vpop.f32.mrf.mxu0
      %453 = vdwg.mxu0
      %v454 = vmax.f32 %v446, 0.0
      %v455 = vmax.f32 %v451, 0.0
      %vm456 = vcmask 31744
      %v457 = vsel %vm456, %v454, 0.0
      %v458 = vsel %vm456, %v455, 0.0
      %v459 = vadd.f32 %v457, %v458
      %v460 = vrot.slane %v459, 4
      %v461 = vadd.f32 %v459, %v460
      %v462 = vrot.slane %v461, 2
      %v463 = vadd.f32 %v461, %v462
      %v464 = vrot.slane %v463, 1
      %v465 = vadd.f32 %v463, %v464
      %v466 = vrcp.pop 16.0
      %v467 = vmul.f32 %v465, %v466
      %v468 = vsel %vm456, %v454, -inf
      %v469 = vsel %vm456, %v455, -inf
      %v470 = vmax.f32 %v468, %v469
      %v471 = vrot.slane %v470, 4
      %v472 = vmax.f32 %v470, %v471
      %v473 = vrot.slane %v472, 2
      %v474 = vmax.f32 %v472, %v473
      %v475 = vrot.slane %v474, 1
      %v476 = vmax.f32 %v474, %v475
      %vm477 = vcmask 1040384
      %v478 = vsel %vm477, %v467, %v476
      %vm481 = vcmask 1041408
      %v482 = vrot.slane %v196, 6
      %v483 = vrot.slane %v197, 6
      %v484 = vsel %vm481, %v482, %v483
      %v486 = vsel %vm456, %v478, 0
      %vm488 = vcmask 1043456
      %v489 = vsel %vm488, %v484, 0
      %491 = vmatprep.subr.mxu0 0.0
      %492 = vmatpush1.msra.mxu0 0.0
      %493 = vmatprep.subr.mxu0 0.0
      %494 = vmatpush1.msra.mxu0 0.0
      %495 = vmatprep.subr.mxu0 0.0
      %496 = vmatpush1.msra.mxu0 0.0
      %497 = vmatprep.subr.mxu0 0.0
      %498 = vmatpush1.msra.mxu0 0.0
      %499 = vmatprep.subr.mxu0 0.0
      %500 = vmatpush1.msra.mxu0 0.0
      %501 = vmatprep.subr.mxu0 0.0
      %502 = vmatpush1.msra.mxu0 0.0
      %503 = vmatprep.subr.mxu0 0.0
      %504 = vmatpush1.msra.mxu0 0.0
      %505 = vmatprep.subr.mxu0 0.0
      %506 = vmatpush1.msra.mxu0 0.0
      %507 = vmatprep.subr.mxu0 0.0
      %508 = vmatpush1.msra.mxu0 0.0
      %509 = vmatprep.subr.mxu0 0.0
      %510 = vmatpush1.msra.mxu0 0.0
      %511 = vmatprep.subr.mxu0 0.0
      %512 = vmatpush1.msra.mxu0 0.0
      %513 = vmatprep.subr.mxu0 0.0
      %514 = vmatpush1.msra.mxu0 0.0
      %515 = vmatprep.subr.mxu0 0.0
      %516 = vmatpush1.msra.mxu0 0.0
      %517 = vmatprep.subr.mxu0 0.0
      %518 = vmatpush1.msra.mxu0 0.0
      %519 = vmatprep.subr.mxu0 0.0
      %520 = vmatpush1.msra.mxu0 0.0
      %521 = vmatprep.subr.mxu0 0.0
      %522 = vmatpush1.msra.mxu0 %v489
      %523 = vmatprep.subr.mxu0 0.0
      %524 = vmatpush2.msra.mxu0 0.0
      %525 = vmatprep.subr.mxu0 0.0
      %526 = vmatpush2.msra.mxu0 0.0
      %527 = vmatprep.subr.mxu0 0.0
      %528 = vmatpush2.msra.mxu0 0.0
      %529 = vmatprep.subr.mxu0 0.0
      %530 = vmatpush2.msra.mxu0 0.0
      %531 = vmatprep.subr.mxu0 0.0
      %532 = vmatpush2.msra.mxu0 0.0
      %533 = vmatprep.subr.mxu0 0.0
      %534 = vmatpush2.msra.mxu0 0.0
      %535 = vmatprep.subr.mxu0 0.0
      %536 = vmatpush2.msra.mxu0 0.0
      %537 = vmatprep.subr.mxu0 0.0
      %538 = vmatpush2.msra.mxu0 0.0
      %539 = vmatprep.subr.mxu0 0.0
      %540 = vmatpush2.msra.mxu0 0.0
      %541 = vmatprep.subr.mxu0 0.0
      %542 = vmatpush2.msra.mxu0 0.0
      %543 = vmatprep.subr.mxu0 0.0
      %544 = vmatpush2.msra.mxu0 0.0
      %545 = vmatprep.subr.mxu0 0.0
      %546 = vmatpush2.msra.mxu0 0.0
      %547 = vmatprep.subr.mxu0 0.0
      %548 = vmatpush2.msra.mxu0 0.0
      %549 = vmatprep.subr.mxu0 0.0
      %550 = vmatpush2.msra.mxu0 0.0
      %551 = vmatprep.subr.mxu0 0.0
      %552 = vmatpush2.msra.mxu0 0.0
      %553 = vmatprep.subr.mxu0 0.0
      %554 = vmatpush2.msra.mxu0 0.0
      %555 = vmatprep.mubr.f32.mxu0 0.0
      %556 = vmatmul.mubr.f32.gmra.mxu0 %v486
      %v557 = vpop.f32.mrf.mxu0
      %v558 = vadd.f32 0.0, %v557
      %v559 = vpop.f32.mrf.mxu0
      %560 = vdwg.mxu0
      %v561 = vmax.f32 %v558, 0.0
      %v562 = vrot.slane %v197, 2
      %vm563 = vcmask 15360
      %v565 = vsel %vm563, %v561, 0
      %v567 = vsel %vm481, %v562, 0
      %569 = vmatprep.subr.mxu0 0.0
      %570 = vmatpush1.msra.mxu0 0.0
      %571 = vmatprep.subr.mxu0 0.0
      %572 = vmatpush1.msra.mxu0 0.0
      %573 = vmatprep.subr.mxu0 0.0
      %574 = vmatpush1.msra.mxu0 0.0
      %575 = vmatprep.subr.mxu0 0.0
      %576 = vmatpush1.msra.mxu0 0.0
      %577 = vmatprep.subr.mxu0 0.0
      %578 = vmatpush1.msra.mxu0 0.0
      %579 = vmatprep.subr.mxu0 0.0
      %580 = vmatpush1.msra.mxu0 0.0
      %581 = vmatprep.subr.mxu0 0.0
      %582 = vmatpush1.msra.mxu0 0.0
      %583 = vmatprep.subr.mxu0 0.0
      %584 = vmatpush1.msra.mxu0 0.0
      %585 = vmatprep.subr.mxu0 0.0
      %586 = vmatpush1.msra.mxu0 0.0
      %587 = vmatprep.subr.mxu0 0.0
      %588 = vmatpush1.msra.mxu0 0.0
      %589 = vmatprep.subr.mxu0 0.0
      %590 = vmatpush1.msra.mxu0 0.0
      %591 = vmatprep.subr.mxu0 0.0
      %592 = vmatpush1.msra.mxu0 0.0
      %593 = vmatprep.subr.mxu0 0.0
      %594 = vmatpush1.msra.mxu0 0.0
      %595 = vmatprep.subr.mxu0 0.0
      %596 = vmatpush1.msra.mxu0 0.0
      %597 = vmatprep.subr.mxu0 0.0
      %598 = vmatpush1.msra.mxu0 0.0
      %599 = vmatprep.subr.mxu0 0.0
      %600 = vmatpush1.msra.mxu0 %v567
      %601 = vmatprep.subr.mxu0 0.0
      %602 = vmatpush2.msra.mxu0 0.0
      %603 = vmatprep.subr.mxu0 0.0
      %604 = vmatpush2.msra.mxu0 0.0
      %605 = vmatprep.subr.mxu0 0.0
      %606 = vmatpush2.msra.mxu0 0.0
      %607 = vmatprep.subr.mxu0 0.0
      %608 = vmatpush2.msra.mxu0 0.0
      %609 = vmatprep.subr.mxu0 0.0
      %610 = vmatpush2.msra.mxu0 0.0
      %611 = vmatprep.subr.mxu0 0.0
      %612 = vmatpush2.msra.mxu0 0.0
      %613 = vmatprep.subr.mxu0 0.0
      %614 = vmatpush2.msra.mxu0 0.0
      %615 = vmatprep.subr.mxu0 0.0
      %616 = vmatpush2.msra.mxu0 0.0
      %617 = vmatprep.subr.mxu0 0.0
      %618 = vmatpush2.msra.mxu0 0.0
      %619 = vmatprep.subr.mxu0 0.0
      %620 = vmatpush2.msra.mxu0 0.0
      %621 = vmatprep.subr.mxu0 0.0
      %622 = vmatpush2.msra.mxu0 0.0
      %623 = vmatprep.subr.mxu0 0.0
      %624 = vmatpush2.msra.mxu0 0.0
      %625 = vmatprep.subr.mxu0 0.0
      %626 = vmatpush2.msra.mxu0 0.0
      %627 = vmatprep.subr.mxu0 0.0
      %628 = vmatpush2.msra.mxu0 0.0
      %629 = vmatprep.subr.mxu0 0.0
      %630 = vmatpush2.msra.mxu0 0.0
      %631 = vmatprep.subr.mxu0 0.0
      %632 = vmatpush2.msra.mxu0 0.0
      %633 = vmatprep.mubr.f32.mxu0 0.0
      %634 = vmatmul.mubr.f32.gmra.mxu0 %v565
      %v635 = vpop.f32.mrf.mxu0
      %v636 = vadd.f32 0.0, %v635
      %v637 = vpop.f32.mrf.mxu0
      %638 = vdwg.mxu0
      %v640 = vrot.slane %v636, 1
      %v642 = vadd.f32 %v636, %v640
      %v643 = vxor.u32 %v642, 2147483648
      %v644 = vmul.f32 %v643, 1.442695
      %v645 = vpow.pop %v644
      %v646 = vadd.f32 %v645, 1.0
      %v647 = vrcp.pop %v646
      %v648 = vmul.f32 1.0, %v647
      %v649 = vlaneseq
      %v650 = vshrl.u32 %v649, 7
      %v651 = vsub.s32 0, %v650
      %v652 = vrot.slane %v648, %v651
      %v653 = vmul.f32 %v454, %v652
      %v654 = vmul.f32 %v455, %v652
      %v656 = vsel %vm456, %v653, 0
      %v659 = vsel %vm456, %v654, 0
      %v661 = vsel %vm488, %v196, 0
      %663 = vmatprep.subr.mxu0 0.0
      %664 = vmatpush1.msra.mxu0 0.0
      %665 = vmatprep.subr.mxu0 0.0
      %666 = vmatpush1.msra.mxu0 0.0
      %667 = vmatprep.subr.mxu0 0.0
      %668 = vmatpush1.msra.mxu0 0.0
      %669 = vmatprep.subr.mxu0 0.0
      %670 = vmatpush1.msra.mxu0 0.0
      %671 = vmatprep.subr.mxu0 0.0
      %672 = vmatpush1.msra.mxu0 0.0
      %673 = vmatprep.subr.mxu0 0.0
      %674 = vmatpush1.msra.mxu0 0.0
      %675 = vmatprep.subr.mxu0 0.0
      %676 = vmatpush1.msra.mxu0 0.0
      %677 = vmatprep.subr.mxu0 0.0
      %678 = vmatpush1.msra.mxu0 0.0
      %679 = vmatprep.subr.mxu0 0.0
      %680 = vmatpush1.msra.mxu0 0.0
      %681 = vmatprep.subr.mxu0 0.0
      %682 = vmatpush1.msra.mxu0 0.0
      %683 = vmatprep.subr.mxu0 0.0
      %684 = vmatpush1.msra.mxu0 0.0
      %685 = vmatprep.subr.mxu0 0.0
      %686 = vmatpush1.msra.mxu0 0.0
      %687 = vmatprep.subr.mxu0 0.0
      %688 = vmatpush1.msra.mxu0 0.0
      %689 = vmatprep.subr.mxu0 0.0
      %690 = vmatpush1.msra.mxu0 0.0
      %691 = vmatprep.subr.mxu0 0.0
      %692 = vmatpush1.msra.mxu0 0.0
      %693 = vmatprep.subr.mxu0 0.0
      %694 = vmatpush1.msra.mxu0 %v661
      %695 = vmatprep.subr.mxu0 0.0
      %696 = vmatpush2.msra.mxu0 0.0
      %697 = vmatprep.subr.mxu0 0.0
      %698 = vmatpush2.msra.mxu0 0.0
      %699 = vmatprep.subr.mxu0 0.0
      %700 = vmatpush2.msra.mxu0 0.0
      %701 = vmatprep.subr.mxu0 0.0
      %702 = vmatpush2.msra.mxu0 0.0
      %703 = vmatprep.subr.mxu0 0.0
      %704 = vmatpush2.msra.mxu0 0.0
      %705 = vmatprep.subr.mxu0 0.0
      %706 = vmatpush2.msra.mxu0 0.0
      %707 = vmatprep.subr.mxu0 0.0
      %708 = vmatpush2.msra.mxu0 0.0
      %709 = vmatprep.subr.mxu0 0.0
      %710 = vmatpush2.msra.mxu0 0.0
      %711 = vmatprep.subr.mxu0 0.0
      %712 = vmatpush2.msra.mxu0 0.0
      %713 = vmatprep.subr.mxu0 0.0
      %714 = vmatpush2.msra.mxu0 0.0
      %715 = vmatprep.subr.mxu0 0.0
      %716 = vmatpush2.msra.mxu0 0.0
      %717 = vmatprep.subr.mxu0 0.0
      %718 = vmatpush2.msra.mxu0 0.0
      %719 = vmatprep.subr.mxu0 0.0
      %720 = vmatpush2.msra.mxu0 0.0
      %721 = vmatprep.subr.mxu0 0.0
      %722 = vmatpush2.msra.mxu0 0.0
      %723 = vmatprep.subr.mxu0 0.0
      %724 = vmatpush2.msra.mxu0 0.0
      %725 = vmatprep.subr.mxu0 0.0
      %726 = vmatpush2.msra.mxu0 0.0
      %727 = vmatprep.mubr.f32.mxu0 0.0
      %728 = vmatmul.mubr.f32.gmra.mxu0 %v656
      %v729 = vpop.f32.mrf.mxu0
      %v730 = vadd.f32 0.0, %v729
      %v731 = vpop.f32.mrf.mxu0
      %732 = vmatprep.mubr.f32.mxu0 0.0
      %733 = vmatmul.mubr.f32.gmra.mxu0 %v659
      %v734 = vpop.f32.mrf.mxu0
      %v735 = vadd.f32 0.0, %v734
      %v736 = vpop.f32.mrf.mxu0
      %737 = vdwg.mxu0
      %740 = vrot.lane.b32.xlu0 %v730, 123
      %v741 = vpop.permute.xlu0 %740
      %742 = vrot.lane.b32.xlu0 %v735, 123
      %v743 = vpop.permute.xlu0 %742
      %746 = vxpose.xlu0.b32.start [1/16] %v741, 128
      %747 = vxpose.xlu0.b32.cont [2/16] %v743, 128
      %748 = vxpose.xlu0.b32.cont [3/16] 0.0, 128
      %749 = vxpose.xlu0.b32.cont [4/16] 0.0, 128
      %750 = vxpose.xlu0.b32.cont [5/16] 0.0, 128
      %751 = vxpose.xlu0.b32.cont [6/16] 0.0, 128
      %752 = vxpose.xlu0.b32.cont [7/16] 0.0, 128
      %753 = vxpose.xlu0.b32.cont [8/16] 0.0, 128
      %754 = vxpose.xlu0.b32.cont [9/16] 0.0, 128
      %755 = vxpose.xlu0.b32.cont [10/16] 0.0, 128
      %756 = vxpose.xlu0.b32.cont [11/16] 0.0, 128
      %757 = vxpose.xlu0.b32.cont [12/16] 0.0, 128
      %758 = vxpose.xlu0.b32.cont [13/16] 0.0, 128
      %759 = vxpose.xlu0.b32.cont [14/16] 0.0, 128
      %760 = vxpose.xlu0.b32.cont [15/16] 0.0, 128
      %761 = vxpose.xlu0.b32.end [16/16] 0.0, 128
      %v762 = vpop.trf.xlu0
      %v763 = vpop.trf.xlu0
      %v764 = vpop.trf.xlu0
      %v765 = vpop.trf.xlu0
      %v766 = vpop.trf.xlu0
      %v767 = vpop.trf.xlu0
      %v768 = vpop.trf.xlu0
      %v769 = vpop.trf.xlu0
      %v770 = vpop.trf.xlu0
      %v771 = vpop.trf.xlu0
      %v772 = vpop.trf.xlu0
      %v773 = vpop.trf.xlu0
      %v774 = vpop.trf.xlu0
      %v775 = vpop.trf.xlu0
      %v776 = vpop.trf.xlu0
      %v777 = vpop.trf.xlu0
      %778 = vset.pattern.permute.xlu0 4
      %779 = vperm.xlu0 %778, %v730
      %v780 = vpop.permute.xlu0 %779
      %782 = vset.pattern.permute.xlu0 4
      %783 = vperm.xlu0 %782, %v735
      %v784 = vpop.permute.xlu0 %783
      %v786 = vlaneseq
      %v787 = vshrl.u32 %v786, 7
      %v788 = vsub.s32 0, %v787
      %v789 = vrot.slane %v762, %v788
      %v790 = vadd.f32 %v780, %v789
      %v791 = vadd.f32 %v784, %v789
      %vm792 = vcmp.gt.f32.partialorder %v790, 0.0
      %vm793 = vcmp.gt.f32.partialorder %v791, 0.0
      %v794 = vmul.f32 %v790, 0.2
      %v795 = vmul.f32 %v791, 0.2
      %v796 = vsel %vm792, %v790, %v794
      %v797 = vsel %vm793, %v791, %v795
      %v798 = vsel %vm342, %v796, -1e+30
      %v799 = vsel %vm343, %v797, -1e+30
      %v800 = vsel %vm346, %v798, -inf
      %801 = vmax.xlane.f32.xlu0 %v800
      %v802 = vpop.xlane.xlu0 %801
      %v803 = vsel %vm346, %v799, -inf
      %804 = vmax.xlane.f32.xlu0 %v803
      %v805 = vpop.xlane.xlu0 %804
      %v806 = vsub.f32 %v798, %v802
      %v807 = vsub.f32 %v799, %v805
      %v808 = vmul.f32 %v806, 1.442695
      %v809 = vpow.pop %v808
      %v810 = vmul.f32 %v807, 1.442695
      %v811 = vpow.pop %v810
      %v812 = vsel %vm346, %v809, 0.0
      %813 = vadd.xlane.f32.xlu0 %v812
      %v814 = vpop.xlane.xlu0 %813
      %v815 = vsel %vm346, %v811, 0.0
      %816 = vadd.xlane.f32.xlu0 %v815
      %v817 = vpop.xlane.xlu0 %816
      %v818 = vrcp.pop %v814
      %v819 = vmul.f32 %v809, %v818
      %v820 = vrcp.pop %v817
      %v821 = vmul.f32 %v811, %v820
      %v822 = vlaneseq
      %v823 = vshrl.u32 %v822, 7
      %v824 = vsub.s32 5, %v823
      %v825 = vrot.slane %v196, %v824
      %v827 = vsel %vm346, %v819, 0
      %v830 = vsel %vm346, %v821, 0
      %832 = vmatprep.subr.mxu0 0.0
      %833 = vmatpush1.msra.mxu0 0.0
      %834 = vmatprep.subr.mxu0 0.0
      %835 = vmatpush1.msra.mxu0 0.0
      %836 = vmatprep.subr.mxu0 0.0
      %837 = vmatpush1.msra.mxu0 0.0
      %838 = vmatprep.subr.mxu0 0.0
      %839 = vmatpush1.msra.mxu0 0.0
      %840 = vmatprep.subr.mxu0 0.0
      %841 = vmatpush1.msra.mxu0 0.0
      %842 = vmatprep.subr.mxu0 0.0
      %843 = vmatpush1.msra.mxu0 0.0
      %844 = vmatprep.subr.mxu0 0.0
      %845 = vmatpush1.msra.mxu0 0.0
      %846 = vmatprep.subr.mxu0 0.0
      %847 = vmatpush1.msra.mxu0 0.0
      %848 = vmatprep.subr.mxu0 0.0
      %849 = vmatpush1.msra.mxu0 0.0
      %850 = vmatprep.subr.mxu0 0.0
      %851 = vmatpush1.msra.mxu0 0.0
      %852 = vmatprep.subr.mxu0 0.0
      %853 = vmatpush1.msra.mxu0 0.0
      %854 = vmatprep.subr.mxu0 0.0
      %855 = vmatpush1.msra.mxu0 0.0
      %856 = vmatprep.subr.mxu0 0.0
      %857 = vmatpush1.msra.mxu0 0.0
      %858 = vmatprep.subr.mxu0 0.0
      %859 = vmatpush1.msra.mxu0 0.0
      %860 = vmatprep.subr.mxu0 0.0
      %861 = vmatpush1.msra.mxu0 %v735
      %862 = vmatprep.subr.mxu0 0.0
      %863 = vmatpush1.msra.mxu0 %v730
      %864 = vmatprep.subr.mxu0 0.0
      %865 = vmatpush2.msra.mxu0 0.0
      %866 = vmatprep.subr.mxu0 0.0
      %867 = vmatpush2.msra.mxu0 0.0
      %868 = vmatprep.subr.mxu0 0.0
      %869 = vmatpush2.msra.mxu0 0.0
      %870 = vmatprep.subr.mxu0 0.0
      %871 = vmatpush2.msra.mxu0 0.0
      %872 = vmatprep.subr.mxu0 0.0
      %873 = vmatpush2.msra.mxu0 0.0
      %874 = vmatprep.subr.mxu0 0.0
      %875 = vmatpush2.msra.mxu0 0.0
      %876 = vmatprep.subr.mxu0 0.0
      %877 = vmatpush2.msra.mxu0 0.0
      %878 = vmatprep.subr.mxu0 0.0
      %879 = vmatpush2.msra.mxu0 0.0
      %880 = vmatprep.subr.mxu0 0.0
      %881 = vmatpush2.msra.mxu0 0.0
      %882 = vmatprep.subr.mxu0 0.0
      %883 = vmatpush2.msra.mxu0 0.0
      %884 = vmatprep.subr.mxu0 0.0
      %885 = vmatpush2.msra.mxu0 0.0
      %886 = vmatprep.subr.mxu0 0.0
      %887 = vmatpush2.msra.mxu0 0.0
      %888 = vmatprep.subr.mxu0 0.0
      %889 = vmatpush2.msra.mxu0 0.0
      %890 = vmatprep.subr.mxu0 0.0
      %891 = vmatpush2.msra.mxu0 0.0
      %892 = vmatprep.subr.mxu0 0.0
      %893 = vmatpush2.msra.mxu0 0.0
      %894 = vmatprep.subr.mxu0 0.0
      %895 = vmatpush2.msra.mxu0 0.0
      %896 = vmatprep.mubr.f32.mxu0 0.0
      %897 = vmatmul.mubr.f32.gmra.mxu0 %v827
      %v898 = vpop.f32.mrf.mxu0
      %v899 = vadd.f32 %v825, %v898
      %v900 = vpop.f32.mrf.mxu0
      %901 = vmatprep.mubr.f32.mxu0 0.0
      %902 = vmatmul.mubr.f32.gmra.mxu0 %v830
      %v903 = vpop.f32.mrf.mxu0
      %v904 = vadd.f32 %v825, %v903
      %v905 = vpop.f32.mrf.mxu0
      %906 = vdwg.mxu0
      %v907 = vmax.f32 %v899, 0.0
      %v908 = vmax.f32 %v904, 0.0
      %v909 = vsel %vm456, %v907, 0.0
      %v910 = vsel %vm456, %v908, 0.0
      %v911 = vadd.f32 %v909, %v910
      %v912 = vrot.slane %v911, 4
      %v913 = vadd.f32 %v911, %v912
      %v914 = vrot.slane %v913, 2
      %v915 = vadd.f32 %v913, %v914
      %v916 = vrot.slane %v915, 1
      %v917 = vadd.f32 %v915, %v916
      %v918 = vmul.f32 %v917, %v466
      %v919 = vsel %vm456, %v907, -inf
      %v920 = vsel %vm456, %v908, -inf
      %v921 = vmax.f32 %v919, %v920
      %v922 = vrot.slane %v921, 4
      %v923 = vmax.f32 %v921, %v922
      %v924 = vrot.slane %v923, 2
      %v925 = vmax.f32 %v923, %v924
      %v926 = vrot.slane %v925, 1
      %v927 = vmax.f32 %v925, %v926
      %v928 = vsel %vm477, %v918, %v927
      %v929 = vrot.slane %v197, 4
      %v931 = vsel %vm456, %v928, 0
      %v933 = vsel %vm488, %v929, 0
      %935 = vmatprep.subr.mxu0 0.0
      %936 = vmatpush1.msra.mxu0 0.0
      %937 = vmatprep.subr.mxu0 0.0
      %938 = vmatpush1.msra.mxu0 0.0
      %939 = vmatprep.subr.mxu0 0.0
      %940 = vmatpush1.msra.mxu0 0.0
      %941 = vmatprep.subr.mxu0 0.0
      %942 = vmatpush1.msra.mxu0 0.0
      %943 = vmatprep.subr.mxu0 0.0
      %944 = vmatpush1.msra.mxu0 0.0
      %945 = vmatprep.subr.mxu0 0.0
      %946 = vmatpush1.msra.mxu0 0.0
      %947 = vmatprep.subr.mxu0 0.0
      %948 = vmatpush1.msra.mxu0 0.0
      %949 = vmatprep.subr.mxu0 0.0
      %950 = vmatpush1.msra.mxu0 0.0
      %951 = vmatprep.subr.mxu0 0.0
      %952 = vmatpush1.msra.mxu0 0.0
      %953 = vmatprep.subr.mxu0 0.0
      %954 = vmatpush1.msra.mxu0 0.0
      %955 = vmatprep.subr.mxu0 0.0
      %956 = vmatpush1.msra.mxu0 0.0
      %957 = vmatprep.subr.mxu0 0.0
      %958 = vmatpush1.msra.mxu0 0.0
      %959 = vmatprep.subr.mxu0 0.0
      %960 = vmatpush1.msra.mxu0 0.0
      %961 = vmatprep.subr.mxu0 0.0
      %962 = vmatpush1.msra.mxu0 0.0
      %963 = vmatprep.subr.mxu0 0.0
      %964 = vmatpush1.msra.mxu0 0.0
      %965 = vmatprep.subr.mxu0 0.0
      %966 = vmatpush1.msra.mxu0 %v933
      %967 = vmatprep.subr.mxu0 0.0
      %968 = vmatpush2.msra.mxu0 0.0
      %969 = vmatprep.subr.mxu0 0.0
      %970 = vmatpush2.msra.mxu0 0.0
      %971 = vmatprep.subr.mxu0 0.0
      %972 = vmatpush2.msra.mxu0 0.0
      %973 = vmatprep.subr.mxu0 0.0
      %974 = vmatpush2.msra.mxu0 0.0
      %975 = vmatprep.subr.mxu0 0.0
      %976 = vmatpush2.msra.mxu0 0.0
      %977 = vmatprep.subr.mxu0 0.0
      %978 = vmatpush2.msra.mxu0 0.0
      %979 = vmatprep.subr.mxu0 0.0
      %980 = vmatpush2.msra.mxu0 0.0
      %981 = vmatprep.subr.mxu0 0.0
      %982 = vmatpush2.msra.mxu0 0.0
      %983 = vmatprep.subr.mxu0 0.0
      %984 = vmatpush2.msra.mxu0 0.0
      %985 = vmatprep.subr.mxu0 0.0
      %986 = vmatpush2.msra.mxu0 0.0
      %987 = vmatprep.subr.mxu0 0.0
      %988 = vmatpush2.msra.mxu0 0.0
      %989 = vmatprep.subr.mxu0 0.0
      %990 = vmatpush2.msra.mxu0 0.0
      %991 = vmatprep.subr.mxu0 0.0
      %992 = vmatpush2.msra.mxu0 0.0
      %993 = vmatprep.subr.mxu0 0.0
      %994 = vmatpush2.msra.mxu0 0.0
      %995 = vmatprep.subr.mxu0 0.0
      %996 = vmatpush2.msra.mxu0 0.0
      %997 = vmatprep.subr.mxu0 0.0
      %998 = vmatpush2.msra.mxu0 0.0
      %999 = vmatprep.mubr.f32.mxu0 0.0
      %1000 = vmatmul.mubr.f32.gmra.mxu0 %v931
      %v1001 = vpop.f32.mrf.mxu0
      %v1002 = vadd.f32 0.0, %v1001
      %v1003 = vpop.f32.mrf.mxu0
      %1004 = vdwg.mxu0
      %v1005 = vmax.f32 %v1002, 0.0
      %v1007 = vsel %vm563, %v1005, 0
      %v1010 = vsel %vm481, %v198, 0
      %1012 = vmatprep.subr.mxu0 0.0
      %1013 = vmatpush1.msra.mxu0 0.0
      %1014 = vmatprep.subr.mxu0 0.0
      %1015 = vmatpush1.msra.mxu0 0.0
      %1016 = vmatprep.subr.mxu0 0.0
      %1017 = vmatpush1.msra.mxu0 0.0
      %1018 = vmatprep.subr.mxu0 0.0
      %1019 = vmatpush1.msra.mxu0 0.0
      %1020 = vmatprep.subr.mxu0 0.0
      %1021 = vmatpush1.msra.mxu0 0.0
      %1022 = vmatprep.subr.mxu0 0.0
      %1023 = vmatpush1.msra.mxu0 0.0
      %1024 = vmatprep.subr.mxu0 0.0
      %1025 = vmatpush1.msra.mxu0 0.0
      %1026 = vmatprep.subr.mxu0 0.0
      %1027 = vmatpush1.msra.mxu0 0.0
      %1028 = vmatprep.subr.mxu0 0.0
      %1029 = vmatpush1.msra.mxu0 0.0
      %1030 = vmatprep.subr.mxu0 0.0
      %1031 = vmatpush1.msra.mxu0 0.0
      %1032 = vmatprep.subr.mxu0 0.0
      %1033 = vmatpush1.msra.mxu0 0.0
      %1034 = vmatprep.subr.mxu0 0.0
      %1035 = vmatpush1.msra.mxu0 0.0
      %1036 = vmatprep.subr.mxu0 0.0
      %1037 = vmatpush1.msra.mxu0 0.0
      %1038 = vmatprep.subr.mxu0 0.0
      %1039 = vmatpush1.msra.mxu0 0.0
      %1040 = vmatprep.subr.mxu0 0.0
      %1041 = vmatpush1.msra.mxu0 0.0
      %1042 = vmatprep.subr.mxu0 0.0
      %1043 = vmatpush1.msra.mxu0 %v1010
      %1044 = vmatprep.subr.mxu0 0.0
      %1045 = vmatpush2.msra.mxu0 0.0
      %1046 = vmatprep.subr.mxu0 0.0
      %1047 = vmatpush2.msra.mxu0 0.0
      %1048 = vmatprep.subr.mxu0 0.0
      %1049 = vmatpush2.msra.mxu0 0.0
      %1050 = vmatprep.subr.mxu0 0.0
      %1051 = vmatpush2.msra.mxu0 0.0
      %1052 = vmatprep.subr.mxu0 0.0
      %1053 = vmatpush2.msra.mxu0 0.0
      %1054 = vmatprep.subr.mxu0 0.0
      %1055 = vmatpush2.msra.mxu0 0.0
      %1056 = vmatprep.subr.mxu0 0.0
      %1057 = vmatpush2.msra.mxu0 0.0
      %1058 = vmatprep.subr.mxu0 0.0
      %1059 = vmatpush2.msra.mxu0 0.0
      %1060 = vmatprep.subr.mxu0 0.0
      %1061 = vmatpush2.msra.mxu0 0.0
      %1062 = vmatprep.subr.mxu0 0.0
      %1063 = vmatpush2.msra.mxu0 0.0
      %1064 = vmatprep.subr.mxu0 0.0
      %1065 = vmatpush2.msra.mxu0 0.0
      %1066 = vmatprep.subr.mxu0 0.0
      %1067 = vmatpush2.msra.mxu0 0.0
      %1068 = vmatprep.subr.mxu0 0.0
      %1069 = vmatpush2.msra.mxu0 0.0
      %1070 = vmatprep.subr.mxu0 0.0
      %1071 = vmatpush2.msra.mxu0 0.0
      %1072 = vmatprep.subr.mxu0 0.0
      %1073 = vmatpush2.msra.mxu0 0.0
      %1074 = vmatprep.subr.mxu0 0.0
      %1075 = vmatpush2.msra.mxu0 0.0
      %1076 = vmatprep.mubr.f32.mxu0 0.0
      %1077 = vmatmul.mubr.f32.gmra.mxu0 %v1007
      %v1078 = vpop.f32.mrf.mxu0
      %v1079 = vadd.f32 0.0, %v1078
      %v1080 = vpop.f32.mrf.mxu0
      %1081 = vdwg.mxu0
      %v1083 = vrot.slane %v1079, 1
      %v1085 = vadd.f32 %v1079, %v1083
      %v1086 = vxor.u32 %v1085, 2147483648
      %v1087 = vmul.f32 %v1086, 1.442695
      %v1088 = vpow.pop %v1087
      %v1089 = vadd.f32 %v1088, 1.0
      %v1090 = vrcp.pop %v1089
      %v1091 = vmul.f32 1.0, %v1090
      %v1092 = vlaneseq
      %v1093 = vshrl.u32 %v1092, 7
      %v1094 = vsub.s32 0, %v1093
      %v1095 = vrot.slane %v1091, %v1094
      %v1096 = vmul.f32 %v907, %v1095
      %v1097 = vmul.f32 %v908, %v1095
      %v1098 = vrot.slane %v198, 4
      %1099 = vrot.lane.b32.xlu0 %v274, 122
      %v1100 = vpop.permute.xlu0 %1099
      %1101 = vrot.lane.b32.xlu0 %v279, 122
      %v1102 = vpop.permute.xlu0 %1101
      %v1106 = vsel %vm456, %v1096, 0
      %v1109 = vsel %vm456, %v1097, 0
      %v1111 = vsel %vm488, %v1098, 0
      %1113 = vmatprep.subr.mxu0 0.0
      %1114 = vmatpush1.msra.mxu0 0.0
      %1115 = vmatprep.subr.mxu0 0.0
      %1116 = vmatpush1.msra.mxu0 0.0
      %1117 = vmatprep.subr.mxu0 0.0
      %1118 = vmatpush1.msra.mxu0 0.0
      %1119 = vmatprep.subr.mxu0 0.0
      %1120 = vmatpush1.msra.mxu0 0.0
      %1121 = vmatprep.subr.mxu0 0.0
      %1122 = vmatpush1.msra.mxu0 0.0
      %1123 = vmatprep.subr.mxu0 0.0
      %1124 = vmatpush1.msra.mxu0 0.0
      %1125 = vmatprep.subr.mxu0 0.0
      %1126 = vmatpush1.msra.mxu0 0.0
      %1127 = vmatprep.subr.mxu0 0.0
      %1128 = vmatpush1.msra.mxu0 0.0
      %1129 = vmatprep.subr.mxu0 0.0
      %1130 = vmatpush1.msra.mxu0 0.0
      %1131 = vmatprep.subr.mxu0 0.0
      %1132 = vmatpush1.msra.mxu0 0.0
      %1133 = vmatprep.subr.mxu0 0.0
      %1134 = vmatpush1.msra.mxu0 0.0
      %1135 = vmatprep.subr.mxu0 0.0
      %1136 = vmatpush1.msra.mxu0 0.0
      %1137 = vmatprep.subr.mxu0 0.0
      %1138 = vmatpush1.msra.mxu0 0.0
      %1139 = vmatprep.subr.mxu0 0.0
      %1140 = vmatpush1.msra.mxu0 0.0
      %1141 = vmatprep.subr.mxu0 0.0
      %1142 = vmatpush1.msra.mxu0 0.0
      %1143 = vmatprep.subr.mxu0 0.0
      %1144 = vmatpush1.msra.mxu0 %v1111
      %1145 = vmatprep.subr.mxu0 0.0
      %1146 = vmatpush2.msra.mxu0 0.0
      %1147 = vmatprep.subr.mxu0 0.0
      %1148 = vmatpush2.msra.mxu0 0.0
      %1149 = vmatprep.subr.mxu0 0.0
      %1150 = vmatpush2.msra.mxu0 0.0
      %1151 = vmatprep.subr.mxu0 0.0
      %1152 = vmatpush2.msra.mxu0 0.0
      %1153 = vmatprep.subr.mxu0 0.0
      %1154 = vmatpush2.msra.mxu0 0.0
      %1155 = vmatprep.subr.mxu0 0.0
      %1156 = vmatpush2.msra.mxu0 0.0
      %1157 = vmatprep.subr.mxu0 0.0
      %1158 = vmatpush2.msra.mxu0 0.0
      %1159 = vmatprep.subr.mxu0 0.0
      %1160 = vmatpush2.msra.mxu0 0.0
      %1161 = vmatprep.subr.mxu0 0.0
      %1162 = vmatpush2.msra.mxu0 0.0
      %1163 = vmatprep.subr.mxu0 0.0
      %1164 = vmatpush2.msra.mxu0 0.0
      %1165 = vmatprep.subr.mxu0 0.0
      %1166 = vmatpush2.msra.mxu0 0.0
      %1167 = vmatprep.subr.mxu0 0.0
      %1168 = vmatpush2.msra.mxu0 0.0
      %1169 = vmatprep.subr.mxu0 0.0
      %1170 = vmatpush2.msra.mxu0 0.0
      %1171 = vmatprep.subr.mxu0 0.0
      %1172 = vmatpush2.msra.mxu0 0.0
      %1173 = vmatprep.subr.mxu0 0.0
      %1174 = vmatpush2.msra.mxu0 0.0
      %1175 = vmatprep.subr.mxu0 0.0
      %1176 = vmatpush2.msra.mxu0 0.0
      %1177 = vmatprep.mubr.f32.mxu0 0.0
      %1178 = vmatmul.mubr.f32.gmra.mxu0 %v1106
      %v1179 = vpop.f32.mrf.mxu0
      %v1180 = vadd.f32 %v1100, %v1179
      %v1181 = vpop.f32.mrf.mxu0
      %1182 = vmatprep.mubr.f32.mxu0 0.0
      %1183 = vmatmul.mubr.f32.gmra.mxu0 %v1109
      %v1184 = vpop.f32.mrf.mxu0
      %v1185 = vadd.f32 %v1102, %v1184
      %v1186 = vpop.f32.mrf.mxu0
      %1187 = vdwg.mxu0
      %v1188 = vlaneseq
      %v1189 = vshrl.u32 %v1188, 7
      %v1190 = vsub.s32 0, %v1189
      %v1191 = vrot.slane %v199, %v1190
      %v1192 = vadd.f32 %v1180, %v1191
      %v1193 = vadd.f32 %v1185, %v1191
      %v1194 = vxor.u32 %v1192, 2147483648
      %v1195 = vxor.u32 %v1193, 2147483648
      %v1196 = vmul.f32 %v1194, 1.442695
      %v1197 = vpow.pop %v1196
      %v1198 = vmul.f32 %v1195, 1.442695
      %v1199 = vpow.pop %v1198
      %v1200 = vadd.f32 %v1197, 1.0
      %v1201 = vadd.f32 %v1199, 1.0
      %v1202 = vrcp.pop %v1200
      %v1203 = vmul.f32 1.0, %v1202
      %v1204 = vrcp.pop %v1201
      %v1205 = vmul.f32 1.0, %v1204
      %vm1206 = vcmask 7168
      %1207 = vst.msk [vmem:[%s190] sm:$0xff] %vm1206, %v1203
      %1208 = vst.msk [vmem:[%s190 + $0x8] sm:$0xff] %vm1206, %v1205
      %p1209 = scmp.lt.s32.totalorder %s14, 7
      %s1210 = scalar_select %p1209, %s14, 7
      %s1211 = smul.addr %s1210, 2
      %s1212 = smul.addr %s1211, 8
      %s1213 = scalar_lea.vmem %s3, %s1212
      // Predicated region
      $region33: #{tpu_custom_call.1} parent=31 // pred_check
        %p1214 = pneg %p105
      $region34: #{tpu_custom_call.1} parent=31 // pred_check_branch
        %1216 = sbr.rel (%p1214) target = $region36
      $region35: #{tpu_custom_call.1} parent=31 // pred_region
        _
      $region36: #{tpu_custom_call.1} parent=31 // pred_fallthru
        _
    $region32: #{tpu_custom_call.1} parent=5 // pred_fallthru
      _
    %p1217 = scmp.le.s32.totalorder 2, %s9
    // Predicated region
    $region37: #{tpu_custom_call.1} parent=5 // pred_check
      %p1218 = pneg %p1217
    $region38: #{tpu_custom_call.1} parent=5 // pred_check_branch
      %1220 = sbr.rel (%p1218) target = $region40
    $region39: #{tpu_custom_call.1} parent=5 // pred_region
      %s1221 = ssub.s32 %s9, 2
      // Predicated region
      $region41: #{tpu_custom_call.1} parent=39 // pred_check
        %p1222 = pneg %p111
      $region42: #{tpu_custom_call.1} parent=39 // pred_check_branch
        %1224 = sbr.rel (%p1222) target = $region44
      $region43: #{tpu_custom_call.1} parent=39 // pred_region
        %p1225 = scmp.lt.s32.totalorder %s15, 7
        %s1226 = scalar_select %p1225, %s15, 7
        %s1227 = smul.addr %s1226, 2
        %s1228 = smul.addr %s1227, 8
        %s1229 = scalar_lea.vmem %s3, %s1228
      $region44: #{tpu_custom_call.1} parent=39 // pred_fallthru
        _
    $region40: #{tpu_custom_call.1} parent=5 // pred_fallthru
      _
  $region6: #{tpu_custom_call.1} parent=0 // loop_footer
    %s13 = sadd.s32 1, %s9
  $region7: #{tpu_custom_call.1} parent=0 // loop_footer_branch
    %8 = sbr.rel target = $region3
  $region8: #{tpu_custom_call.1} parent=0 // loop_exit
    _

</llo_original>
